<compile_context>
chip_gen: v6e
topology: v6e:2x2x1
jax: 0.10.0
libtpu: 0.0.40
codegen_flags: <defaults>
</compile_context>

<pallas_src>
import math
import numpy as np
import jax
import jax.numpy as jnp
from jax.experimental import pallas as pl
from jax.experimental.pallas import tpu as pltpu

# ---------------- configuration ----------------
B, TQ, TKV = 2, 8, 16          # batch, query tokens (latents), kv tokens
DQ, DKV = 32, 48               # in_q_channels, in_kv_channels
H = 4                          # num_heads
QK = 64                        # out_qk_channels
V = 32                         # out_v_channels (== DQ, required by the torch module)
QKH = QK // H                  # per-head qk dim (16)
VH = V // H                    # per-head v dim  (8)
HID = 4 * V                    # MLP hidden (widening factor 4)
EPS = 1e-5                     # nn.LayerNorm default eps
SCALE = 1.0 / math.sqrt(QKH)
LANES = 128
NBT = B * TQ                   # stacked query rows (16)

# ---------------- slab layouts (row offsets are compile-time constants) ----------------
# bf16 weight/constant slab: everything starts at lane 0, row offsets are multiples of 16.
_W_SHAPES = [
    ("wq",    DQ,       QK),     # query projection (SCALE folded in)
    ("wk",    DKV,      QK),
    ("wv",    DKV,      V),
    ("w1",    V,        HID),
    ("w2",    HID,      V),
    ("kmask", H * TKV,  QK),     # 0/1 block-diag head mask for K
    ("vmask", H * TKV,  V),      # 0/1 block-diag head mask for V (also the seg-sum matrix)
    ("sel",   H * NBT,  NBT),    # row-gather realizing torch's raw .view
    ("mst",   H * NBT,  V),      # head mask applied after the row-gather
    ("wrep",  H * V,    DQ),     # row-tiled copies of wo (one [V, DQ] block per view group)
]
_W = {}
_off = 0
for _name, _r, _c in _W_SHAPES:
    _W[_name] = _off
    _off += _r
W_SLAB_ROWS = _off             # 672 (multiple of 16)

# f32 bias/gain slab: one row per vector.
_B_NAMES = ["q_g", "q_b", "kv_g", "kv_b", "an_g", "an_b",
            "bq", "bk", "bv", "bo", "b1", "b2"]
_B = {n: i for i, n in enumerate(_B_NAMES)}
B_SLAB_ROWS = 16


# ---------------- in-kernel helpers (elementwise math stays f32) ----------------
def _ln(x, g, b):
    mu = jnp.mean(x, axis=-1, keepdims=True)
    var = jnp.mean((x - mu) ** 2, axis=-1, keepdims=True)
    return (x - mu) * jax.lax.rsqrt(var + EPS) * g + b


def _gelu_tanh(x):
    # tanh-approximate GELU (single EUP tanh); within ~3e-3 of torch's exact erf GELU.
    c = 0.7978845608028654  # sqrt(2/pi)
    return 0.5 * x * (1.0 + jnp.tanh(c * (x + 0.044715 * x * x * x)))


# ---------------- fused kernel ----------------
def cross_attention_kernel(xq_ref, xkv_ref, w_ref, b_ref, o_ref):
    f32, bf16 = jnp.float32, jnp.bfloat16

    def wslice(name, rows, cols):            # static carve from the bf16 weight slab
        off = _W[name]
        return w_ref[off:off + rows, 0:cols]

    def brow(name, cols):                    # static carve from the f32 bias slab
        r = _B[name]
        return b_ref[r:r + 1, 0:cols]

    xq = xq_ref[...]                                            # [B*TQ, DQ]  f32
    xkv = xkv_ref[...]                                          # [B*TKV, DKV] f32

    xq_ln = _ln(xq, brow("q_g", DQ), brow("q_b", DQ)).astype(bf16)
    xkv_ln = _ln(xkv, brow("kv_g", DKV), brow("kv_b", DKV)).astype(bf16)

    # shared projections for both batch elements (SCALE pre-folded into wq / bq)
    q = jnp.dot(xq_ln, wslice("wq", DQ, QK), preferred_element_type=f32) + brow("bq", QK)
    k = jnp.dot(xkv_ln, wslice("wk", DKV, QK), preferred_element_type=f32) + brow("bk", QK)
    v = jnp.dot(xkv_ln, wslice("wv", DKV, V), preferred_element_type=f32) + brow("bv", V)

    kmask = wslice("kmask", H * TKV, QK)                        # [64, 64] bf16 0/1
    vmask = wslice("vmask", H * TKV, V)                         # [64, 32] bf16 0/1

    # ---- attention core: heads on the lane axis, unrolled over the 2 batch elements
    o_parts = []
    for b in range(B):
        qb = q[b * TQ:(b + 1) * TQ, :].astype(bf16)             # [TQ, QK]
        kb = k[b * TKV:(b + 1) * TKV, :].astype(bf16)           # [TKV, QK]
        vb = v[b * TKV:(b + 1) * TKV, :].astype(bf16)           # [TKV, V]

        k_bd = jnp.concatenate([kb] * H, axis=0) * kmask        # [H*TKV, QK] block-diag
        v_bd = jnp.concatenate([vb] * H, axis=0) * vmask        # [H*TKV, V]  block-diag

        # s[t, h*TKV + T] = <q_h[t], k_h[T]>  (one NT matmul for all heads)
        s = jax.lax.dot_general(qb, k_bd, (((1,), (1,)), ((), ())),
                                preferred_element_type=f32)     # [TQ, H*TKV]
        # a single global per-row max is a valid stabilizer (cancels per head segment)
        s = s - jnp.max(s, axis=-1, keepdims=True)
        p = jnp.exp(s).astype(bf16)

        o_un = jnp.dot(p, v_bd, preferred_element_type=f32)     # [TQ, V] unnormalized, cols h*VH+d
        l_bc = jnp.dot(p, vmask, preferred_element_type=f32)    # per-head denominators, bcast over VH
        o_parts.append(o_un * pl.reciprocal(l_bc, approx=True))

    o16 = jnp.concatenate(o_parts, axis=0).astype(bf16)         # [B*TQ, V]

    # ---- output projection fused with torch's raw view(B, TQ, H*VH) of the
    # contiguous [B, H, TQ, VH] einsum result: constant row-gather (sel), head
    # mask (mst), and H row-tiled copies of wo (wrep).
    sel = wslice("sel", H * NBT, NBT)                           # [H*NBT, NBT] bf16
    mst = wslice("mst", H * NBT, V)                             # [H*NBT, V]   bf16
    g_all = jnp.dot(sel, o16, preferred_element_type=f32).astype(bf16) * mst
    wrep = wslice("wrep", H * V, DQ)                            # [H*V, DQ]    bf16
    attn = brow("bo", DQ)                                       # [1, DQ]
    for g in range(H):
        attn = attn + jnp.dot(g_all[g * NBT:(g + 1) * NBT, :],
                              wrep[g * V:(g + 1) * V, :],
                              preferred_element_type=f32)       # [B*TQ, DQ]

    # ---- residual + attn_norm + MLP (all dropout probs are 0 -> identity)
    x = xq + attn
    an = _ln(attn, brow("an_g", V), brow("an_b", V)).astype(bf16)
    h1 = jnp.dot(an, wslice("w1", V, HID), preferred_element_type=f32) + brow("b1", HID)
    h1 = _gelu_tanh(h1).astype(bf16)
    h2 = jnp.dot(h1, wslice("w2", HID, V), preferred_element_type=f32) + brow("b2", V)
    o_ref[...] = x + h2


# ---------------- host-side constant builders ----------------
def _build_head_masks():
    kmask = np.zeros((H * TKV, QK), np.float32)
    vmask = np.zeros((H * TKV, V), np.float32)
    for h in range(H):
        kmask[h * TKV:(h + 1) * TKV, h * QKH:(h + 1) * QKH] = 1.0
        vmask[h * TKV:(h + 1) * TKV, h * VH:(h + 1) * VH] = 1.0
    return kmask, vmask


def _build_view_epilogue_constants(wo):
    """Constants realizing `view(B,TQ,H*VH) @ wo`, where view is torch's raw reshape
    of the contiguous [B, H, TQ, VH] einsum output, starting from the lane-major
    attention output o[b*TQ + t, h*VH + d] = summed[b, h, t, d]."""
    sel = np.zeros((H * NBT, NBT), np.float32)
    mst = np.zeros((H * NBT, V), np.float32)
    wrep = np.zeros((H * V, DQ), np.float32)
    for g in range(H):                                  # view column group c = g*VH + d
        for tp in range(TQ):
            h = (tp * H + g) // TQ
            t = (tp * H + g) % TQ
            for b in range(B):
                sel[g * NBT + b * TQ + tp, b * TQ + t] = 1.0
                mst[g * NBT + b * TQ + tp, h * VH:(h + 1) * VH] = 1.0
        for hh in range(H):
            wrep[g * V + hh * VH:g * V + (hh + 1) * VH, :] = wo[g * VH:(g + 1) * VH, :]
    # numeric self-check against torch's .view semantics
    rng = np.random.RandomState(0)
    summed = rng.randn(B, H, TQ, VH).astype(np.float32)
    o_lane = np.zeros((NBT, V), np.float32)
    for b in range(B):
        for h in range(H):
            for t in range(TQ):
                o_lane[b * TQ + t, h * VH:(h + 1) * VH] = summed[b, h, t]
    ref = summed.reshape(B, TQ, H * VH) @ wo
    got = np.zeros((NBT, DQ), np.float32)
    for g in range(H):
        gsel = (sel[g * NBT:(g + 1) * NBT] @ o_lane) * mst[g * NBT:(g + 1) * NBT]
        got += gsel @ wrep[g * V:(g + 1) * V]
    assert np.allclose(got.reshape(B, TQ, DQ), ref, atol=1e-5), "view-epilogue constants wrong"
    return sel, mst, wrep


def prepare_kernel_params(p):
    """Pack all parameters into one bf16 weight slab and one f32 bias slab."""
    kmask, vmask = _build_head_masks()
    sel, mst, wrep = _build_view_epilogue_constants(np.asarray(p["wo"], np.float32))
    tensors = dict(
        wq=np.asarray(p["wq"], np.float32) * SCALE,
        wk=np.asarray(p["wk"], np.float32),
        wv=np.asarray(p["wv"], np.float32),
        w1=np.asarray(p["w1"], np.float32),
        w2=np.asarray(p["w2"], np.float32),
        kmask=kmask, vmask=vmask, sel=sel, mst=mst, wrep=wrep,
    )
    wslab = np.zeros((W_SLAB_ROWS, LANES), np.float32)
    for name, r, c in _W_SHAPES:
        arr = tensors[name]
        assert arr.shape == (r, c), (name, arr.shape, (r, c))
        wslab[_W[name]:_W[name] + r, :c] = arr

    biases = dict(
        q_g=p["q_g"], q_b=p["q_b"], kv_g=p["kv_g"], kv_b=p["kv_b"],
        an_g=p["an_g"], an_b=p["an_b"],
        bq=np.asarray(p["bq"], np.float32) * SCALE,
        bk=p["bk"], bv=p["bv"], bo=p["bo"], b1=p["b1"], b2=p["b2"],
    )
    bslab = np.zeros((B_SLAB_ROWS, LANES), np.float32)
    for name, row in _B.items():
        arr = np.asarray(biases[name], np.float32).reshape(-1)
        bslab[row, :arr.size] = arr
    return jnp.asarray(wslab, jnp.bfloat16), jnp.asarray(bslab, jnp.float32)


# ---------------- wrapper (single invocation, whole arrays resident in VMEM) ----------------
def cross_attention_forward(inputs_q, inputs_kv, wslab, bslab):
    xq2 = inputs_q.reshape(B * TQ, DQ)
    xkv2 = inputs_kv.reshape(B * TKV, DKV)
    out = pl.pallas_call(
        cross_attention_kernel,
        out_shape=jax.ShapeDtypeStruct((B * TQ, DQ), jnp.float32),
        in_specs=[pl.BlockSpec(memory_space=pltpu.MemorySpace.VMEM)] * 4,
        out_specs=pl.BlockSpec(memory_space=pltpu.MemorySpace.VMEM),
    )(xq2, xkv2, wslab, bslab)
    return out.reshape(B, TQ, DQ)


# ---------------- pure-JAX reference (mirrors the torch code exactly) ----------------
def reference(inputs_q, inputs_kv, p):
    def ln(x, g, b):
        mu = x.mean(-1, keepdims=True)
        var = ((x - mu) ** 2).mean(-1, keepdims=True)
        return (x - mu) / jnp.sqrt(var + EPS) * g + b

    xq = ln(inputs_q, p["q_g"], p["q_b"])
    xkv = ln(inputs_kv, p["kv_g"], p["kv_b"])
    q = (xq @ p["wq"] + p["bq"]).reshape(B, TQ, H, QKH)
    k = (xkv @ p["wk"] + p["bk"]).reshape(B, TKV, H, QKH)
    v = (xkv @ p["wv"] + p["bv"]).reshape(B, TKV, H, VH)
    att = jnp.einsum('bthd,bThd->bhtT', q, k) * SCALE
    norm = jax.nn.softmax(att, axis=-1)
    # torch's view: raw row-major reshape of the contiguous [B, H, TQ, VH] result.
    summed = jnp.einsum('bhtT,bThd->bhtd', norm, v).reshape(B, TQ, H * VH)
    attn_out = summed @ p["wo"] + p["bo"]
    x = inputs_q + attn_out
    an = ln(attn_out, p["an_g"], p["an_b"])
    h1 = jax.nn.gelu(an @ p["w1"] + p["b1"], approximate=False)
    h2 = h1 @ p["w2"] + p["b2"]
    return x + h2


if __name__ == "__main__":
    key = jax.random.PRNGKey(0)
    keys = jax.random.split(key, 20)

    def nrm(k, shape, scale=0.1):
        return scale * jax.random.normal(k, shape, jnp.float32)

    params = dict(
        q_g=1.0 + nrm(keys[0], (1, DQ)),   q_b=nrm(keys[1], (1, DQ)),
        kv_g=1.0 + nrm(keys[2], (1, DKV)), kv_b=nrm(keys[3], (1, DKV)),
        an_g=1.0 + nrm(keys[4], (1, V)),   an_b=nrm(keys[5], (1, V)),
        wq=nrm(keys[6], (DQ, QK)),   bq=nrm(keys[7], (1, QK)),
        wk=nrm(keys[8], (DKV, QK)),  bk=nrm(keys[9], (1, QK)),
        wv=nrm(keys[10], (DKV, V)),  bv=nrm(keys[11], (1, V)),
        wo=nrm(keys[12], (V, DQ)),   bo=nrm(keys[13], (1, DQ)),
        w1=nrm(keys[14], (V, HID)),  b1=nrm(keys[15], (1, HID)),
        w2=nrm(keys[16], (HID, V)),  b2=nrm(keys[17], (1, V)),
    )
    inputs_q = jax.random.normal(keys[18], (B, TQ, DQ), jnp.float32)
    inputs_kv = jax.random.normal(keys[19], (B, TKV, DKV), jnp.float32)

    wslab, bslab = prepare_kernel_params(params)
    out = cross_attention_forward(inputs_q, inputs_kv, wslab, bslab)
    out = jax.block_until_ready(out)

    with jax.default_matmul_precision("highest"):
        ref = jax.block_until_ready(reference(inputs_q, inputs_kv, params))

    assert out.shape == (B, TQ, DQ), out.shape
    max_err = float(jnp.max(jnp.abs(out - ref)))
    # Tolerance covers the intentional bf16 single-pass MXU operands, the tanh-approx
    # GELU and the approximate reciprocal (reference is exact f32 / exact-erf GELU).
    assert max_err < 3e-2, f"max abs error too large: {max_err}"
    print("KERNEL_OK")
</pallas_src>

<mosaic_0001>
module attributes {stable_mosaic.version = 11 : i64} {
  func.func @cross_attention_kernel(%arg0: memref<16x32xf32, #tpu.memory_space<vmem>>, %arg1: memref<32x48xf32, #tpu.memory_space<vmem>>, %arg2: memref<672x128xbf16, #tpu.memory_space<vmem>>, %arg3: memref<16x128xf32, #tpu.memory_space<vmem>>, %arg4: memref<16x32xf32, #tpu.memory_space<vmem>>) attributes {dimension_semantics = [], scalar_prefetch = 0 : i64, scratch_operands = 0 : i64, tpu.core_type = #tpu.core_type<tc>} {
    %c0 = arith.constant 0 : index
    %c0_0 = arith.constant 0 : index
    %0 = vector.load %arg0[%c0, %c0_0] : memref<16x32xf32, #tpu.memory_space<vmem>>, vector<16x32xf32>
    %c0_1 = arith.constant 0 : index
    %c0_2 = arith.constant 0 : index
    %1 = vector.load %arg1[%c0_1, %c0_2] : memref<32x48xf32, #tpu.memory_space<vmem>>, vector<32x48xf32>
    %c0_3 = arith.constant 0 : index
    %c0_4 = arith.constant 0 : index
    %2 = vector.load %arg3[%c0_3, %c0_4] : memref<16x128xf32, #tpu.memory_space<vmem>>, vector<1x32xf32>
    %c1 = arith.constant 1 : index
    %c0_5 = arith.constant 0 : index
    %3 = vector.load %arg3[%c1, %c0_5] : memref<16x128xf32, #tpu.memory_space<vmem>>, vector<1x32xf32>
    %cst = arith.constant dense<0.000000e+00> : vector<16xf32>
    %4 = vector.multi_reduction <add>, %0, %cst [1] : vector<16x32xf32> to vector<16xf32>
    %5 = vector.shape_cast %4 : vector<16xf32> to vector<16x1xf32>
    %cst_6 = arith.constant 3.200000e+01 : f32
    %6 = vector.broadcast %cst_6 : f32 to vector<16x1xf32>
    %7 = arith.divf %5, %6 : vector<16x1xf32>
    %8 = vector.broadcast %7 : vector<16x1xf32> to vector<16x32xf32>
    %9 = arith.subf %0, %8 : vector<16x32xf32>
    %10 = arith.mulf %9, %9 : vector<16x32xf32>
    %cst_7 = arith.constant dense<0.000000e+00> : vector<16xf32>
    %11 = vector.multi_reduction <add>, %10, %cst_7 [1] : vector<16x32xf32> to vector<16xf32>
    %12 = vector.shape_cast %11 : vector<16xf32> to vector<16x1xf32>
    %cst_8 = arith.constant 3.200000e+01 : f32
    %13 = vector.broadcast %cst_8 : f32 to vector<16x1xf32>
    %14 = arith.divf %12, %13 : vector<16x1xf32>
    %15 = vector.broadcast %7 : vector<16x1xf32> to vector<16x32xf32>
    %16 = arith.subf %0, %15 : vector<16x32xf32>
    %cst_9 = arith.constant 9.99999974E-6 : f32
    %17 = vector.broadcast %cst_9 : f32 to vector<16x1xf32>
    %18 = arith.addf %14, %17 : vector<16x1xf32>
    %19 = math.rsqrt %18 : vector<16x1xf32>
    %20 = vector.broadcast %19 : vector<16x1xf32> to vector<16x32xf32>
    %21 = arith.mulf %16, %20 : vector<16x32xf32>
    %22 = vector.broadcast %2 : vector<1x32xf32> to vector<16x32xf32>
    %23 = arith.mulf %21, %22 : vector<16x32xf32>
    %24 = vector.broadcast %3 : vector<1x32xf32> to vector<16x32xf32>
    %25 = arith.addf %23, %24 : vector<16x32xf32>
    %26 = arith.truncf %25 : vector<16x32xf32> to vector<16x32xbf16>
    %c2 = arith.constant 2 : index
    %c0_10 = arith.constant 0 : index
    %27 = vector.load %arg3[%c2, %c0_10] : memref<16x128xf32, #tpu.memory_space<vmem>>, vector<1x48xf32>
    %c3 = arith.constant 3 : index
    %c0_11 = arith.constant 0 : index
    %28 = vector.load %arg3[%c3, %c0_11] : memref<16x128xf32, #tpu.memory_space<vmem>>, vector<1x48xf32>
    %cst_12 = arith.constant dense<0.000000e+00> : vector<32xf32>
    %29 = vector.multi_reduction <add>, %1, %cst_12 [1] : vector<32x48xf32> to vector<32xf32>
    %30 = vector.shape_cast %29 : vector<32xf32> to vector<32x1xf32>
    %cst_13 = arith.constant 4.800000e+01 : f32
    %31 = vector.broadcast %cst_13 : f32 to vector<32x1xf32>
    %32 = arith.divf %30, %31 : vector<32x1xf32>
    %33 = vector.broadcast %32 : vector<32x1xf32> to vector<32x48xf32>
    %34 = arith.subf %1, %33 : vector<32x48xf32>
    %35 = arith.mulf %34, %34 : vector<32x48xf32>
    %cst_14 = arith.constant dense<0.000000e+00> : vector<32xf32>
    %36 = vector.multi_reduction <add>, %35, %cst_14 [1] : vector<32x48xf32> to vector<32xf32>
    %37 = vector.shape_cast %36 : vector<32xf32> to vector<32x1xf32>
    %cst_15 = arith.constant 4.800000e+01 : f32
    %38 = vector.broadcast %cst_15 : f32 to vector<32x1xf32>
    %39 = arith.divf %37, %38 : vector<32x1xf32>
    %40 = vector.broadcast %32 : vector<32x1xf32> to vector<32x48xf32>
    %41 = arith.subf %1, %40 : vector<32x48xf32>
    %cst_16 = arith.constant 9.99999974E-6 : f32
    %42 = vector.broadcast %cst_16 : f32 to vector<32x1xf32>
    %43 = arith.addf %39, %42 : vector<32x1xf32>
    %44 = math.rsqrt %43 : vector<32x1xf32>
    %45 = vector.broadcast %44 : vector<32x1xf32> to vector<32x48xf32>
    %46 = arith.mulf %41, %45 : vector<32x48xf32>
    %47 = vector.broadcast %27 : vector<1x48xf32> to vector<32x48xf32>
    %48 = arith.mulf %46, %47 : vector<32x48xf32>
    %49 = vector.broadcast %28 : vector<1x48xf32> to vector<32x48xf32>
    %50 = arith.addf %48, %49 : vector<32x48xf32>
    %51 = arith.truncf %50 : vector<32x48xf32> to vector<32x48xbf16>
    %c0_17 = arith.constant 0 : index
    %c0_18 = arith.constant 0 : index
    %52 = vector.load %arg2[%c0_17, %c0_18] : memref<672x128xbf16, #tpu.memory_space<vmem>>, vector<32x64xbf16>
    %cst_19 = arith.constant dense<0.000000e+00> : vector<16x64xf32>
    %53 = tpu.matmul %26, %52, %cst_19 {dimension_numbers = #tpu.dot_dimension_numbers<[1], [0], [0], [1], [0, 0, 1, 1], [], []>} : vector<16x32xbf16>, vector<32x64xbf16>, vector<16x64xf32> -> vector<16x64xf32>
    %c6 = arith.constant 6 : index
    %c0_20 = arith.constant 0 : index
    %54 = vector.load %arg3[%c6, %c0_20] : memref<16x128xf32, #tpu.memory_space<vmem>>, vector<1x64xf32>
    %55 = vector.broadcast %54 : vector<1x64xf32> to vector<16x64xf32>
    %56 = arith.addf %53, %55 : vector<16x64xf32>
    %c32 = arith.constant 32 : index
    %c0_21 = arith.constant 0 : index
    %57 = vector.load %arg2[%c32, %c0_21] : memref<672x128xbf16, #tpu.memory_space<vmem>>, vector<48x64xbf16>
    %cst_22 = arith.constant dense<0.000000e+00> : vector<32x64xf32>
    %58 = tpu.matmul %51, %57, %cst_22 {dimension_numbers = #tpu.dot_dimension_numbers<[1], [0], [0], [1], [0, 0, 1, 1], [], []>} : vector<32x48xbf16>, vector<48x64xbf16>, vector<32x64xf32> -> vector<32x64xf32>
    %c7 = arith.constant 7 : index
    %c0_23 = arith.constant 0 : index
    %59 = vector.load %arg3[%c7, %c0_23] : memref<16x128xf32, #tpu.memory_space<vmem>>, vector<1x64xf32>
    %60 = vector.broadcast %59 : vector<1x64xf32> to vector<32x64xf32>
    %61 = arith.addf %58, %60 : vector<32x64xf32>
    %c80 = arith.constant 80 : index
    %c0_24 = arith.constant 0 : index
    %62 = vector.load %arg2[%c80, %c0_24] : memref<672x128xbf16, #tpu.memory_space<vmem>>, vector<48x32xbf16>
    %cst_25 = arith.constant dense<0.000000e+00> : vector<32x32xf32>
    %63 = tpu.matmul %51, %62, %cst_25 {dimension_numbers = #tpu.dot_dimension_numbers<[1], [0], [0], [1], [0, 0, 1, 1], [], []>} : vector<32x48xbf16>, vector<48x32xbf16>, vector<32x32xf32> -> vector<32x32xf32>
    %c8 = arith.constant 8 : index
    %c0_26 = arith.constant 0 : index
    %64 = vector.load %arg3[%c8, %c0_26] : memref<16x128xf32, #tpu.memory_space<vmem>>, vector<1x32xf32>
    %65 = vector.broadcast %64 : vector<1x32xf32> to vector<32x32xf32>
    %66 = arith.addf %63, %65 : vector<32x32xf32>
    %c288 = arith.constant 288 : index
    %c0_27 = arith.constant 0 : index
    %67 = vector.load %arg2[%c288, %c0_27] : memref<672x128xbf16, #tpu.memory_space<vmem>>, vector<64x64xbf16>
    %c352 = arith.constant 352 : index
    %c0_28 = arith.constant 0 : index
    %68 = vector.load %arg2[%c352, %c0_28] : memref<672x128xbf16, #tpu.memory_space<vmem>>, vector<64x32xbf16>
    %69 = vector.extract_strided_slice %56 {offsets = [0, 0], sizes = [8, 64], strides = [1, 1]} : vector<16x64xf32> to vector<8x64xf32>
    %70 = arith.truncf %69 : vector<8x64xf32> to vector<8x64xbf16>
    %71 = vector.extract_strided_slice %61 {offsets = [0, 0], sizes = [16, 64], strides = [1, 1]} : vector<32x64xf32> to vector<16x64xf32>
    %72 = arith.truncf %71 : vector<16x64xf32> to vector<16x64xbf16>
    %73 = vector.extract_strided_slice %66 {offsets = [0, 0], sizes = [16, 32], strides = [1, 1]} : vector<32x32xf32> to vector<16x32xf32>
    %74 = arith.truncf %73 : vector<16x32xf32> to vector<16x32xbf16>
    %75 = tpu.concatenate %72, %72, %72, %72 in 0 : vector<16x64xbf16>, vector<16x64xbf16>, vector<16x64xbf16>, vector<16x64xbf16> -> vector<64x64xbf16>
    %76 = arith.mulf %75, %67 : vector<64x64xbf16>
    %77 = tpu.concatenate %74, %74, %74, %74 in 0 : vector<16x32xbf16>, vector<16x32xbf16>, vector<16x32xbf16>, vector<16x32xbf16> -> vector<64x32xbf16>
    %78 = arith.mulf %77, %68 : vector<64x32xbf16>
    %cst_29 = arith.constant dense<0.000000e+00> : vector<8x64xf32>
    %79 = tpu.matmul %70, %76, %cst_29 {dimension_numbers = #tpu.dot_dimension_numbers<[1], [1], [0], [0], [0, 0, 1, 0], [], []>} : vector<8x64xbf16>, vector<64x64xbf16>, vector<8x64xf32> -> vector<8x64xf32>
    %cst_30 = arith.constant dense<0xFF800000> : vector<8xf32>
    %80 = vector.multi_reduction <maximumf>, %79, %cst_30 [1] : vector<8x64xf32> to vector<8xf32>
    %81 = vector.shape_cast %80 : vector<8xf32> to vector<8x1xf32>
    %82 = vector.broadcast %81 : vector<8x1xf32> to vector<8x64xf32>
    %83 = arith.subf %79, %82 : vector<8x64xf32>
    %84 = math.exp %83 : vector<8x64xf32>
    %85 = arith.truncf %84 : vector<8x64xf32> to vector<8x64xbf16>
    %cst_31 = arith.constant dense<0.000000e+00> : vector<8x32xf32>
    %86 = tpu.matmul %85, %78, %cst_31 {dimension_numbers = #tpu.dot_dimension_numbers<[1], [0], [0], [1], [0, 0, 1, 1], [], []>} : vector<8x64xbf16>, vector<64x32xbf16>, vector<8x32xf32> -> vector<8x32xf32>
    %cst_32 = arith.constant dense<0.000000e+00> : vector<8x32xf32>
    %87 = tpu.matmul %85, %68, %cst_32 {dimension_numbers = #tpu.dot_dimension_numbers<[1], [0], [0], [1], [0, 0, 1, 1], [], []>} : vector<8x64xbf16>, vector<64x32xbf16>, vector<8x32xf32> -> vector<8x32xf32>
    %88 = tpu.reciprocal %87 {approx = true} : vector<8x32xf32> -> vector<8x32xf32>
    %89 = arith.mulf %86, %88 : vector<8x32xf32>
    %90 = vector.extract_strided_slice %56 {offsets = [8, 0], sizes = [8, 64], strides = [1, 1]} : vector<16x64xf32> to vector<8x64xf32>
    %91 = arith.truncf %90 : vector<8x64xf32> to vector<8x64xbf16>
    %92 = vector.extract_strided_slice %61 {offsets = [16, 0], sizes = [16, 64], strides = [1, 1]} : vector<32x64xf32> to vector<16x64xf32>
    %93 = arith.truncf %92 : vector<16x64xf32> to vector<16x64xbf16>
    %94 = vector.extract_strided_slice %66 {offsets = [16, 0], sizes = [16, 32], strides = [1, 1]} : vector<32x32xf32> to vector<16x32xf32>
    %95 = arith.truncf %94 : vector<16x32xf32> to vector<16x32xbf16>
    %96 = tpu.concatenate %93, %93, %93, %93 in 0 : vector<16x64xbf16>, vector<16x64xbf16>, vector<16x64xbf16>, vector<16x64xbf16> -> vector<64x64xbf16>
    %97 = arith.mulf %96, %67 : vector<64x64xbf16>
    %98 = tpu.concatenate %95, %95, %95, %95 in 0 : vector<16x32xbf16>, vector<16x32xbf16>, vector<16x32xbf16>, vector<16x32xbf16> -> vector<64x32xbf16>
    %99 = arith.mulf %98, %68 : vector<64x32xbf16>
    %cst_33 = arith.constant dense<0.000000e+00> : vector<8x64xf32>
    %100 = tpu.matmul %91, %97, %cst_33 {dimension_numbers = #tpu.dot_dimension_numbers<[1], [1], [0], [0], [0, 0, 1, 0], [], []>} : vector<8x64xbf16>, vector<64x64xbf16>, vector<8x64xf32> -> vector<8x64xf32>
    %cst_34 = arith.constant dense<0xFF800000> : vector<8xf32>
    %101 = vector.multi_reduction <maximumf>, %100, %cst_34 [1] : vector<8x64xf32> to vector<8xf32>
    %102 = vector.shape_cast %101 : vector<8xf32> to vector<8x1xf32>
    %103 = vector.broadcast %102 : vector<8x1xf32> to vector<8x64xf32>
    %104 = arith.subf %100, %103 : vector<8x64xf32>
    %105 = math.exp %104 : vector<8x64xf32>
    %106 = arith.truncf %105 : vector<8x64xf32> to vector<8x64xbf16>
    %cst_35 = arith.constant dense<0.000000e+00> : vector<8x32xf32>
    %107 = tpu.matmul %106, %99, %cst_35 {dimension_numbers = #tpu.dot_dimension_numbers<[1], [0], [0], [1], [0, 0, 1, 1], [], []>} : vector<8x64xbf16>, vector<64x32xbf16>, vector<8x32xf32> -> vector<8x32xf32>
    %cst_36 = arith.constant dense<0.000000e+00> : vector<8x32xf32>
    %108 = tpu.matmul %106, %68, %cst_36 {dimension_numbers = #tpu.dot_dimension_numbers<[1], [0], [0], [1], [0, 0, 1, 1], [], []>} : vector<8x64xbf16>, vector<64x32xbf16>, vector<8x32xf32> -> vector<8x32xf32>
    %109 = tpu.reciprocal %108 {approx = true} : vector<8x32xf32> -> vector<8x32xf32>
    %110 = arith.mulf %107, %109 : vector<8x32xf32>
    %111 = tpu.concatenate %89, %110 in 0 : vector<8x32xf32>, vector<8x32xf32> -> vector<16x32xf32>
    %112 = arith.truncf %111 : vector<16x32xf32> to vector<16x32xbf16>
    %c416 = arith.constant 416 : index
    %c0_37 = arith.constant 0 : index
    %113 = vector.load %arg2[%c416, %c0_37] : memref<672x128xbf16, #tpu.memory_space<vmem>>, vector<64x16xbf16>
    %c480 = arith.constant 480 : index
    %c0_38 = arith.constant 0 : index
    %114 = vector.load %arg2[%c480, %c0_38] : memref<672x128xbf16, #tpu.memory_space<vmem>>, vector<64x32xbf16>
    %cst_39 = arith.constant dense<0.000000e+00> : vector<64x32xf32>
    %115 = tpu.matmul %113, %112, %cst_39 {dimension_numbers = #tpu.dot_dimension_numbers<[1], [0], [0], [1], [0, 0, 1, 1], [], []>} : vector<64x16xbf16>, vector<16x32xbf16>, vector<64x32xf32> -> vector<64x32xf32>
    %116 = arith.truncf %115 : vector<64x32xf32> to vector<64x32xbf16>
    %117 = arith.mulf %116, %114 : vector<64x32xbf16>
    %c544 = arith.constant 544 : index
    %c0_40 = arith.constant 0 : index
    %118 = vector.load %arg2[%c544, %c0_40] : memref<672x128xbf16, #tpu.memory_space<vmem>>, vector<128x32xbf16>
    %c9 = arith.constant 9 : index
    %c0_41 = arith.constant 0 : index
    %119 = vector.load %arg3[%c9, %c0_41] : memref<16x128xf32, #tpu.memory_space<vmem>>, vector<1x32xf32>
    %120 = vector.extract_strided_slice %117 {offsets = [0, 0], sizes = [16, 32], strides = [1, 1]} : vector<64x32xbf16> to vector<16x32xbf16>
    %121 = vector.extract_strided_slice %118 {offsets = [0, 0], sizes = [32, 32], strides = [1, 1]} : vector<128x32xbf16> to vector<32x32xbf16>
    %cst_42 = arith.constant dense<0.000000e+00> : vector<16x32xf32>
    %122 = tpu.matmul %120, %121, %cst_42 {dimension_numbers = #tpu.dot_dimension_numbers<[1], [0], [0], [1], [0, 0, 1, 1], [], []>} : vector<16x32xbf16>, vector<32x32xbf16>, vector<16x32xf32> -> vector<16x32xf32>
    %123 = vector.broadcast %119 : vector<1x32xf32> to vector<16x32xf32>
    %124 = arith.addf %123, %122 : vector<16x32xf32>
    %125 = vector.extract_strided_slice %117 {offsets = [16, 0], sizes = [16, 32], strides = [1, 1]} : vector<64x32xbf16> to vector<16x32xbf16>
    %126 = vector.extract_strided_slice %118 {offsets = [32, 0], sizes = [32, 32], strides = [1, 1]} : vector<128x32xbf16> to vector<32x32xbf16>
    %cst_43 = arith.constant dense<0.000000e+00> : vector<16x32xf32>
    %127 = tpu.matmul %125, %126, %cst_43 {dimension_numbers = #tpu.dot_dimension_numbers<[1], [0], [0], [1], [0, 0, 1, 1], [], []>} : vector<16x32xbf16>, vector<32x32xbf16>, vector<16x32xf32> -> vector<16x32xf32>
    %128 = arith.addf %124, %127 : vector<16x32xf32>
    %129 = vector.extract_strided_slice %117 {offsets = [32, 0], sizes = [16, 32], strides = [1, 1]} : vector<64x32xbf16> to vector<16x32xbf16>
    %130 = vector.extract_strided_slice %118 {offsets = [64, 0], sizes = [32, 32], strides = [1, 1]} : vector<128x32xbf16> to vector<32x32xbf16>
    %cst_44 = arith.constant dense<0.000000e+00> : vector<16x32xf32>
    %131 = tpu.matmul %129, %130, %cst_44 {dimension_numbers = #tpu.dot_dimension_numbers<[1], [0], [0], [1], [0, 0, 1, 1], [], []>} : vector<16x32xbf16>, vector<32x32xbf16>, vector<16x32xf32> -> vector<16x32xf32>
    %132 = arith.addf %128, %131 : vector<16x32xf32>
    %133 = vector.extract_strided_slice %117 {offsets = [48, 0], sizes = [16, 32], strides = [1, 1]} : vector<64x32xbf16> to vector<16x32xbf16>
    %134 = vector.extract_strided_slice %118 {offsets = [96, 0], sizes = [32, 32], strides = [1, 1]} : vector<128x32xbf16> to vector<32x32xbf16>
    %cst_45 = arith.constant dense<0.000000e+00> : vector<16x32xf32>
    %135 = tpu.matmul %133, %134, %cst_45 {dimension_numbers = #tpu.dot_dimension_numbers<[1], [0], [0], [1], [0, 0, 1, 1], [], []>} : vector<16x32xbf16>, vector<32x32xbf16>, vector<16x32xf32> -> vector<16x32xf32>
    %136 = arith.addf %132, %135 : vector<16x32xf32>
    %137 = arith.addf %0, %136 : vector<16x32xf32>
    %c4 = arith.constant 4 : index
    %c0_46 = arith.constant 0 : index
    %138 = vector.load %arg3[%c4, %c0_46] : memref<16x128xf32, #tpu.memory_space<vmem>>, vector<1x32xf32>
    %c5 = arith.constant 5 : index
    %c0_47 = arith.constant 0 : index
    %139 = vector.load %arg3[%c5, %c0_47] : memref<16x128xf32, #tpu.memory_space<vmem>>, vector<1x32xf32>
    %cst_48 = arith.constant dense<0.000000e+00> : vector<16xf32>
    %140 = vector.multi_reduction <add>, %136, %cst_48 [1] : vector<16x32xf32> to vector<16xf32>
    %141 = vector.shape_cast %140 : vector<16xf32> to vector<16x1xf32>
    %cst_49 = arith.constant 3.200000e+01 : f32
    %142 = vector.broadcast %cst_49 : f32 to vector<16x1xf32>
    %143 = arith.divf %141, %142 : vector<16x1xf32>
    %144 = vector.broadcast %143 : vector<16x1xf32> to vector<16x32xf32>
    %145 = arith.subf %136, %144 : vector<16x32xf32>
    %146 = arith.mulf %145, %145 : vector<16x32xf32>
    %cst_50 = arith.constant dense<0.000000e+00> : vector<16xf32>
    %147 = vector.multi_reduction <add>, %146, %cst_50 [1] : vector<16x32xf32> to vector<16xf32>
    %148 = vector.shape_cast %147 : vector<16xf32> to vector<16x1xf32>
    %cst_51 = arith.constant 3.200000e+01 : f32
    %149 = vector.broadcast %cst_51 : f32 to vector<16x1xf32>
    %150 = arith.divf %148, %149 : vector<16x1xf32>
    %151 = vector.broadcast %143 : vector<16x1xf32> to vector<16x32xf32>
    %152 = arith.subf %136, %151 : vector<16x32xf32>
    %cst_52 = arith.constant 9.99999974E-6 : f32
    %153 = vector.broadcast %cst_52 : f32 to vector<16x1xf32>
    %154 = arith.addf %150, %153 : vector<16x1xf32>
    %155 = math.rsqrt %154 : vector<16x1xf32>
    %156 = vector.broadcast %155 : vector<16x1xf32> to vector<16x32xf32>
    %157 = arith.mulf %152, %156 : vector<16x32xf32>
    %158 = vector.broadcast %138 : vector<1x32xf32> to vector<16x32xf32>
    %159 = arith.mulf %157, %158 : vector<16x32xf32>
    %160 = vector.broadcast %139 : vector<1x32xf32> to vector<16x32xf32>
    %161 = arith.addf %159, %160 : vector<16x32xf32>
    %162 = arith.truncf %161 : vector<16x32xf32> to vector<16x32xbf16>
    %c128 = arith.constant 128 : index
    %c0_53 = arith.constant 0 : index
    %163 = vector.load %arg2[%c128, %c0_53] : memref<672x128xbf16, #tpu.memory_space<vmem>>, vector<32x128xbf16>
    %cst_54 = arith.constant dense<0.000000e+00> : vector<16x128xf32>
    %164 = tpu.matmul %162, %163, %cst_54 {dimension_numbers = #tpu.dot_dimension_numbers<[1], [0], [0], [1], [0, 0, 1, 1], [], []>} : vector<16x32xbf16>, vector<32x128xbf16>, vector<16x128xf32> -> vector<16x128xf32>
    %c10 = arith.constant 10 : index
    %c0_55 = arith.constant 0 : index
    %165 = vector.load %arg3[%c10, %c0_55] : memref<16x128xf32, #tpu.memory_space<vmem>>, vector<1x128xf32>
    %166 = vector.broadcast %165 : vector<1x128xf32> to vector<16x128xf32>
    %167 = arith.addf %164, %166 : vector<16x128xf32>
    %cst_56 = arith.constant 5.000000e-01 : f32
    %168 = vector.broadcast %cst_56 : f32 to vector<16x128xf32>
    %169 = arith.mulf %168, %167 : vector<16x128xf32>
    %cst_57 = arith.constant 4.471500e-02 : f32
    %170 = vector.broadcast %cst_57 : f32 to vector<16x128xf32>
    %171 = arith.mulf %170, %167 : vector<16x128xf32>
    %172 = arith.mulf %171, %167 : vector<16x128xf32>
    %173 = arith.mulf %172, %167 : vector<16x128xf32>
    %174 = arith.addf %167, %173 : vector<16x128xf32>
    %cst_58 = arith.constant 0.797884583 : f32
    %175 = vector.broadcast %cst_58 : f32 to vector<16x128xf32>
    %176 = arith.mulf %175, %174 : vector<16x128xf32>
    %177 = math.tanh %176 : vector<16x128xf32>
    %cst_59 = arith.constant 1.000000e+00 : f32
    %178 = vector.broadcast %cst_59 : f32 to vector<16x128xf32>
    %179 = arith.addf %178, %177 : vector<16x128xf32>
    %180 = arith.mulf %169, %179 : vector<16x128xf32>
    %181 = arith.truncf %180 : vector<16x128xf32> to vector<16x128xbf16>
    %c160 = arith.constant 160 : index
    %c0_60 = arith.constant 0 : index
    %182 = vector.load %arg2[%c160, %c0_60] : memref<672x128xbf16, #tpu.memory_space<vmem>>, vector<128x32xbf16>
    %cst_61 = arith.constant dense<0.000000e+00> : vector<16x32xf32>
    %183 = tpu.matmul %181, %182, %cst_61 {dimension_numbers = #tpu.dot_dimension_numbers<[1], [0], [0], [1], [0, 0, 1, 1], [], []>} : vector<16x128xbf16>, vector<128x32xbf16>, vector<16x32xf32> -> vector<16x32xf32>
    %c11 = arith.constant 11 : index
    %c0_62 = arith.constant 0 : index
    %184 = vector.load %arg3[%c11, %c0_62] : memref<16x128xf32, #tpu.memory_space<vmem>>, vector<1x32xf32>
    %185 = vector.broadcast %184 : vector<1x32xf32> to vector<16x32xf32>
    %186 = arith.addf %183, %185 : vector<16x32xf32>
    %187 = arith.addf %137, %186 : vector<16x32xf32>
    %c0_63 = arith.constant 0 : index
    %c0_64 = arith.constant 0 : index
    %188 = vector.load %arg4[%c0_63, %c0_64] : memref<16x32xf32, #tpu.memory_space<vmem>>, vector<16x32xf32>
    tpu.vector_store %arg4[%c0_63, %c0_64], %187 {strides = array<i32>} : memref<16x32xf32, #tpu.memory_space<vmem>>, vector<16x32xf32>,
    return
  }
}

</mosaic_0001>

<llo_original>
// kernel: tpu_custom_call.1
$region0: #{tpu_custom_call.1}
  #allocation0 [shape = 'u32[]', space=smem, size = 0x4, offset = 0x4, fixed_abs, tag = 'smem constant byte address 0x4 - core index']
  #allocation1 [shape = 'u32[144,128]{1,0:T(1,128)}', space=vmem, size = 0x12000, scoped, tag = 'internal scratch']
  %s0 = inlined_call_operand.hbm [shape: f32[16,32], index: 0, kind: input, shape index: {}]
  %s1 = inlined_call_operand.hbm [shape: f32[32,48], index: 1, kind: input, shape index: {}]
  %s2 = inlined_call_operand.hbm [shape: bf16[672,128], index: 2, kind: input, shape index: {}]
  %s3 = inlined_call_operand.hbm [shape: f32[16,128], index: 3, kind: input, shape index: {}]
  %s4 = inlined_call_operand.hbm [shape: f32[16,32], index: 4, kind: output, shape index: {}]
  %s5 = sld [smem:[#allocation0]]
  $region42: #{tpu_custom_call.1} parent=0
    _
  %s7 = ssub.s32 1, %s5
  %s8 = scalar_select 0, %s7, %s5
  $region1: #{tpu_custom_call.1} parent=0
    #allocation2 [shape = 'u8[8192]{0}', space=vmem, size = 0x2000, scoped, tag = 'input window, operand 0, single buffered']
    #allocation3 [shape = 's32[1]{0}', space=sflag, size = 0x4, scoped, tag = 'scoped memory for tpu_custom_call.1']
    #allocation4 [shape = 's32[1]{0}', space=sflag, size = 0x4, scoped, tag = 'scoped memory for tpu_custom_call.1']
    #allocation5 [shape = 'u8[16384]{0}', space=vmem, size = 0x4000, scoped, tag = 'input window, operand 1, single buffered']
    #allocation6 [shape = 's32[1]{0}', space=sflag, size = 0x4, scoped, tag = 'scoped memory for tpu_custom_call.1']
    #allocation7 [shape = 'u8[172032]{0}', space=vmem, size = 0x2a000, scoped, tag = 'input window, operand 2, single buffered']
    #allocation8 [shape = 'u8[8192]{0}', space=vmem, size = 0x2000, scoped, tag = 'input window, operand 3, single buffered']
    #allocation9 [shape = 's32[1]{0}', space=sflag, size = 0x4, scoped, tag = 'scoped memory for tpu_custom_call.1']
    #allocation10 [shape = 'u8[8192]{0}', space=vmem, size = 0x2000, scoped, tag = 'output window, operand 0, single buffered']
    %9 = vsyncpa [#allocation3], 0
    %10 = vsyncpa [#allocation6], 0
    %11 = vsyncpa [#allocation9], 0
    %12 = vsyncpa [#allocation4], 0
    // Predicated region
    $region2: #{tpu_custom_call.1} parent=1 // pred_check
      _
    $region3: #{tpu_custom_call.1} parent=1 // pred_check_branch
      %14 = sbr.rel (0) target = $region5
    $region4: #{tpu_custom_call.1} parent=1 // pred_region
      %s16 = ssub.s32 256, 256
      %17 = vsyncadd [#allocation3], %s16
      %s18 = sshll.u32 [#allocation2], 4
      %s19 = int_to_ptr.vmem [resolvable:$true] %s18
      %24 = dma.hbm_to_vmem [thread:$0]  %s0, 256, %s19, [#allocation3], 128, 128, 8
    $region5: #{tpu_custom_call.1} parent=1 // pred_fallthru
      _
    // Predicated region
    $region6: #{tpu_custom_call.1} parent=1 // pred_check
      _
    $region7: #{tpu_custom_call.1} parent=1 // pred_check_branch
      %26 = sbr.rel (0) target = $region9
    $region8: #{tpu_custom_call.1} parent=1 // pred_region
      %s28 = ssub.s32 512, 512
      %29 = vsyncadd [#allocation6], %s28
      %s30 = sshll.u32 [#allocation5], 4
      %s31 = int_to_ptr.vmem [resolvable:$true] %s30
      %36 = dma.hbm_to_vmem [thread:$0]  %s1, 512, %s31, [#allocation6], 128, 128, 8
    $region9: #{tpu_custom_call.1} parent=1 // pred_fallthru
      _
    // Predicated region
    $region10: #{tpu_custom_call.1} parent=1 // pred_check
      _
    $region11: #{tpu_custom_call.1} parent=1 // pred_check_branch
      %38 = sbr.rel (0) target = $region13
    $region12: #{tpu_custom_call.1} parent=1 // pred_region
      %s40 = ssub.s32 5376, 5376
      %41 = vsyncadd [#allocation6], %s40
      %s42 = sshll.u32 [#allocation7], 4
      %s43 = int_to_ptr.vmem [resolvable:$true] %s42
      %48 = dma.hbm_to_vmem [thread:$0]  %s2, 5376, %s43, [#allocation6], 64, 64, 4
    $region13: #{tpu_custom_call.1} parent=1 // pred_fallthru
      _
    // Predicated region
    $region14: #{tpu_custom_call.1} parent=1 // pred_check
      _
    $region15: #{tpu_custom_call.1} parent=1 // pred_check_branch
      %50 = sbr.rel (0) target = $region17
    $region16: #{tpu_custom_call.1} parent=1 // pred_region
      %s52 = ssub.s32 256, 256
      %53 = vsyncadd [#allocation9], %s52
      %s54 = sshll.u32 [#allocation8], 4
      %s55 = int_to_ptr.vmem [resolvable:$true] %s54
      %60 = dma.hbm_to_vmem [thread:$0]  %s3, 256, %s55, [#allocation9], 128, 128, 8
    $region17: #{tpu_custom_call.1} parent=1 // pred_fallthru
      _
    // Predicated region
    $region18: #{tpu_custom_call.1} parent=1 // pred_check
      _
    $region19: #{tpu_custom_call.1} parent=1 // pred_check_branch
      %62 = sbr.rel (0) target = $region21
    $region20: #{tpu_custom_call.1} parent=1 // pred_region
      %63 = dma.done [#allocation3], 256
    $region21: #{tpu_custom_call.1} parent=1 // pred_fallthru
      _
    // Predicated region
    $region22: #{tpu_custom_call.1} parent=1 // pred_check
      _
    $region23: #{tpu_custom_call.1} parent=1 // pred_check_branch
      %65 = sbr.rel (0) target = $region25
    $region24: #{tpu_custom_call.1} parent=1 // pred_region
      %66 = dma.done [#allocation6], 512
    $region25: #{tpu_custom_call.1} parent=1 // pred_fallthru
      _
    // Predicated region
    $region26: #{tpu_custom_call.1} parent=1 // pred_check
      _
    $region27: #{tpu_custom_call.1} parent=1 // pred_check_branch
      %68 = sbr.rel (0) target = $region29
    $region28: #{tpu_custom_call.1} parent=1 // pred_region
      %69 = dma.done [#allocation6], 5376
    $region29: #{tpu_custom_call.1} parent=1 // pred_fallthru
      _
    // Predicated region
    $region30: #{tpu_custom_call.1} parent=1 // pred_check
      _
    $region31: #{tpu_custom_call.1} parent=1 // pred_check_branch
      %71 = sbr.rel (0) target = $region33
    $region32: #{tpu_custom_call.1} parent=1 // pred_region
      %72 = dma.done [#allocation9], 256
    $region33: #{tpu_custom_call.1} parent=1 // pred_fallthru
      _
    %v74 = vld [vmem:[#allocation2] sm:$0xff]
    %v75 = vld [vmem:[#allocation2 + $0x8] sm:$0xff]
    %v76 = vld [vmem:[#allocation5] sm:$0xff]
    %v77 = vld [vmem:[#allocation5 + $0x8] sm:$0xff]
    %v78 = vld [vmem:[#allocation5 + $0x10] sm:$0xff]
    %v79 = vld [vmem:[#allocation5 + $0x18] sm:$0xff]
    %v80 = vld [vmem:[#allocation8] sm:$0x1]
    %v81 = vld [vmem:[#allocation8 + $0x1] sm:$0x1]
    %vm82 = vcmask 261120
    %v83 = vsel %vm82, %v74, 0.0
    %84 = vadd.xlane.f32.xlu0 %v83
    %v85 = vpop.xlane.xlu0 %84
    %v86 = vsel %vm82, %v75, 0.0
    %87 = vadd.xlane.f32.xlu0 %v86
    %v88 = vpop.xlane.xlu0 %87
    %v89 = vrcp.pop 32.0
    %v90 = vmul.f32 %v85, %v89
    %v91 = vmul.f32 %v88, %v89
    %v92 = vsub.f32 %v74, %v90
    %v93 = vsub.f32 %v75, %v91
    %v94 = vmul.f32 %v92, %v92
    %v95 = vmul.f32 %v93, %v93
    %v96 = vsel %vm82, %v94, 0.0
    %97 = vadd.xlane.f32.xlu0 %v96
    %v98 = vpop.xlane.xlu0 %97
    %v99 = vsel %vm82, %v95, 0.0
    %100 = vadd.xlane.f32.xlu0 %v99
    %v101 = vpop.xlane.xlu0 %100
    %v102 = vmul.f32 %v98, %v89
    %v103 = vmul.f32 %v101, %v89
    %v104 = vadd.f32 %v102, 1e-05
    %v105 = vadd.f32 %v103, 1e-05
    %v106 = vrsqrt.pop %v104
    %v107 = vrsqrt.pop %v105
    %v108 = vmul.f32 %v92, %v106
    %v109 = vmul.f32 %v93, %v107
    %v110 = vlaneseq
    %v111 = vshrl.u32 %v110, 7
    %v112 = vsub.s32 0, %v111
    %v113 = vrot.slane %v80, %v112
    %v114 = vmul.f32 %v108, %v113
    %v115 = vmul.f32 %v109, %v113
    %v116 = vlaneseq
    %v117 = vshrl.u32 %v116, 7
    %v118 = vsub.s32 0, %v117
    %v119 = vrot.slane %v81, %v118
    %v120 = vadd.f32 %v114, %v119
    %v121 = vadd.f32 %v115, %v119
    %v122 = vpack.c.bf16 %v121, %v120
    %v123 = vld [vmem:[#allocation8 + $0x2] sm:$0x1]
    %v124 = vld [vmem:[#allocation8 + $0x3] sm:$0x1]
    %vm125 = vcmask 392192
    %v126 = vsel %vm125, %v76, 0.0
    %127 = vadd.xlane.f32.xlu0 %v126
    %v128 = vpop.xlane.xlu0 %127
    %v129 = vsel %vm125, %v77, 0.0
    %130 = vadd.xlane.f32.xlu0 %v129
    %v131 = vpop.xlane.xlu0 %130
    %v132 = vsel %vm125, %v78, 0.0
    %133 = vadd.xlane.f32.xlu0 %v132
    %v134 = vpop.xlane.xlu0 %133
    %v135 = vsel %vm125, %v79, 0.0
    %136 = vadd.xlane.f32.xlu0 %v135
    %v137 = vpop.xlane.xlu0 %136
    %v138 = vrcp.pop 48.0
    %v139 = vmul.f32 %v128, %v138
    %v140 = vmul.f32 %v131, %v138
    %v141 = vmul.f32 %v134, %v138
    %v142 = vmul.f32 %v137, %v138
    %v143 = vsub.f32 %v76, %v139
    %v144 = vsub.f32 %v77, %v140
    %v145 = vsub.f32 %v78, %v141
    %v146 = vsub.f32 %v79, %v142
    %v147 = vmul.f32 %v143, %v143
    %v148 = vmul.f32 %v144, %v144
    %v149 = vmul.f32 %v145, %v145
    %v150 = vmul.f32 %v146, %v146
    %v151 = vsel %vm125, %v147, 0.0
    %152 = vadd.xlane.f32.xlu0 %v151
    %v153 = vpop.xlane.xlu0 %152
    %v154 = vsel %vm125, %v148, 0.0
    %155 = vadd.xlane.f32.xlu0 %v154
    %v156 = vpop.xlane.xlu0 %155
    %v157 = vsel %vm125, %v149, 0.0
    %158 = vadd.xlane.f32.xlu0 %v157
    %v159 = vpop.xlane.xlu0 %158
    %v160 = vsel %vm125, %v150, 0.0
    %161 = vadd.xlane.f32.xlu0 %v160
    %v162 = vpop.xlane.xlu0 %161
    %v163 = vmul.f32 %v153, %v138
    %v164 = vmul.f32 %v156, %v138
    %v165 = vmul.f32 %v159, %v138
    %v166 = vmul.f32 %v162, %v138
    %v167 = vadd.f32 %v163, 1e-05
    %v168 = vadd.f32 %v164, 1e-05
    %v169 = vadd.f32 %v165, 1e-05
    %v170 = vadd.f32 %v166, 1e-05
    %v171 = vrsqrt.pop %v167
    %v172 = vrsqrt.pop %v168
    %v173 = vrsqrt.pop %v169
    %v174 = vrsqrt.pop %v170
    %v175 = vmul.f32 %v143, %v171
    %v176 = vmul.f32 %v144, %v172
    %v177 = vmul.f32 %v145, %v173
    %v178 = vmul.f32 %v146, %v174
    %v179 = vlaneseq
    %v180 = vshrl.u32 %v179, 7
    %v181 = vsub.s32 0, %v180
    %v182 = vrot.slane %v123, %v181
    %v183 = vmul.f32 %v175, %v182
    %v184 = vmul.f32 %v176, %v182
    %v185 = vmul.f32 %v177, %v182
    %v186 = vmul.f32 %v178, %v182
    %v187 = vlaneseq
    %v188 = vshrl.u32 %v187, 7
    %v189 = vsub.s32 0, %v188
    %v190 = vrot.slane %v124, %v189
    %v191 = vadd.f32 %v183, %v190
    %v192 = vadd.f32 %v184, %v190
    %v193 = vadd.f32 %v185, %v190
    %v194 = vadd.f32 %v186, %v190
    %v195 = vpack.c.bf16 %v192, %v191
    %v196 = vpack.c.bf16 %v194, %v193
    %v197 = vld [vmem:[#allocation7] sm:$0xf]
    %v198 = vld [vmem:[#allocation7 + $0x4] sm:$0xf]
    %v199 = vld [vmem:[#allocation7 + $0x8] sm:$0xf]
    %v200 = vld [vmem:[#allocation7 + $0xc] sm:$0xf]
    %v201 = vld [vmem:[#allocation8 + $0x6] sm:$0x1]
    %v202 = vlaneseq
    %v203 = vshrl.u32 %v202, 7
    %v204 = vsub.s32 0, %v203
    %v205 = vrot.slane %v201, %v204
    %v210 = vunpack.c.l.b16 %v197
    %v211 = vunpack.c.l.b16 %v198
    %v212 = vunpack.c.l.b16 %v199
    %v213 = vunpack.c.l.b16 %v200
    %v214 = vpack.c.b16 %v211, %v210
    %v215 = vpack.c.b16 %v213, %v212
    %v219 = vsel %vm82, %v122, 0
    %221 = vmatprep.subr.bf16.mxu0 0
    %222 = vmatpush1.bf16.msra.mxu0 0
    %223 = vmatprep.subr.bf16.mxu0 0
    %224 = vmatpush1.bf16.msra.mxu0 0
    %225 = vmatprep.subr.bf16.mxu0 0
    %226 = vmatpush1.bf16.msra.mxu0 0
    %227 = vmatprep.subr.bf16.mxu0 0
    %228 = vmatpush1.bf16.msra.mxu0 0
    %229 = vmatprep.subr.bf16.mxu0 0
    %230 = vmatpush1.bf16.msra.mxu0 0
    %231 = vmatprep.subr.bf16.mxu0 0
    %232 = vmatpush1.bf16.msra.mxu0 0
    %233 = vmatprep.subr.bf16.mxu0 0
    %234 = vmatpush1.bf16.msra.mxu0 %v215
    %235 = vmatprep.subr.bf16.mxu0 0
    %236 = vmatpush1.bf16.msra.mxu0 %v214
    %237 = vmatprep.subr.bf16.mxu0 0
    %238 = vmatpush2.bf16.msra.mxu0 0
    %239 = vmatprep.subr.bf16.mxu0 0
    %240 = vmatpush2.bf16.msra.mxu0 0
    %241 = vmatprep.subr.bf16.mxu0 0
    %242 = vmatpush2.bf16.msra.mxu0 0
    %243 = vmatprep.subr.bf16.mxu0 0
    %244 = vmatpush2.bf16.msra.mxu0 0
    %245 = vmatprep.subr.bf16.mxu0 0
    %246 = vmatpush2.bf16.msra.mxu0 0
    %247 = vmatprep.subr.bf16.mxu0 0
    %248 = vmatpush2.bf16.msra.mxu0 0
    %249 = vmatprep.subr.bf16.mxu0 0
    %250 = vmatpush2.bf16.msra.mxu0 0
    %251 = vmatprep.subr.bf16.mxu0 0
    %252 = vmatpush2.bf16.msra.mxu0 0
    %253 = vmatprep.mubr.bf16.mxu0 0
    %254 = vmatmul.mubr.bf16.gmra.mxu0 %v219
    %v255 = vpop.f32.mrf.mxu0
    %v256 = vadd.f32 %v205, %v255
    %v257 = vpop.f32.mrf.mxu0
    %v258 = vpop.f32.mrf.mxu0
    %v259 = vadd.f32 %v205, %v258
    %v260 = vpop.f32.mrf.mxu0
    %261 = vdwg.mxu0
    %v262 = vld [vmem:[#allocation7 + $0x10] sm:$0xf]
    %v263 = vld [vmem:[#allocation7 + $0x14] sm:$0xf]
    %v264 = vld [vmem:[#allocation7 + $0x18] sm:$0xf]
    %v265 = vld [vmem:[#allocation7 + $0x1c] sm:$0xf]
    %v266 = vld [vmem:[#allocation7 + $0x20] sm:$0xf]
    %v267 = vld [vmem:[#allocation7 + $0x24] sm:$0xf]
    %v268 = vld [vmem:[#allocation8 + $0x7] sm:$0x1]
    %v269 = vlaneseq
    %v270 = vshrl.u32 %v269, 7
    %v271 = vsub.s32 0, %v270
    %v272 = vrot.slane %v268, %v271
    %v279 = vunpack.c.l.b16 %v262
    %v280 = vunpack.c.l.b16 %v263
    %v281 = vunpack.c.l.b16 %v264
    %v282 = vunpack.c.l.b16 %v265
    %v283 = vunpack.c.l.b16 %v266
    %v284 = vunpack.c.l.b16 %v267
    %v285 = vpack.c.b16 %v280, %v279
    %v286 = vpack.c.b16 %v282, %v281
    %v287 = vpack.c.b16 %v284, %v283
    %v292 = vsel %vm125, %v195, 0
    %v295 = vsel %vm125, %v196, 0
    %297 = vmatprep.subr.bf16.mxu0 0
    %298 = vmatpush1.bf16.msra.mxu0 0
    %299 = vmatprep.subr.bf16.mxu0 0
    %300 = vmatpush1.bf16.msra.mxu0 0
    %301 = vmatprep.subr.bf16.mxu0 0
    %302 = vmatpush1.bf16.msra.mxu0 0
    %303 = vmatprep.subr.bf16.mxu0 0
    %304 = vmatpush1.bf16.msra.mxu0 0
    %305 = vmatprep.subr.bf16.mxu0 0
    %306 = vmatpush1.bf16.msra.mxu0 0
    %307 = vmatprep.subr.bf16.mxu0 0
    %308 = vmatpush1.bf16.msra.mxu0 %v287
    %309 = vmatprep.subr.bf16.mxu0 0
    %310 = vmatpush1.bf16.msra.mxu0 %v286
    %311 = vmatprep.subr.bf16.mxu0 0
    %312 = vmatpush1.bf16.msra.mxu0 %v285
    %313 = vmatprep.subr.bf16.mxu0 0
    %314 = vmatpush2.bf16.msra.mxu0 0
    %315 = vmatprep.subr.bf16.mxu0 0
    %316 = vmatpush2.bf16.msra.mxu0 0
    %317 = vmatprep.subr.bf16.mxu0 0
    %318 = vmatpush2.bf16.msra.mxu0 0
    %319 = vmatprep.subr.bf16.mxu0 0
    %320 = vmatpush2.bf16.msra.mxu0 0
    %321 = vmatprep.subr.bf16.mxu0 0
    %322 = vmatpush2.bf16.msra.mxu0 0
    %323 = vmatprep.subr.bf16.mxu0 0
    %324 = vmatpush2.bf16.msra.mxu0 0
    %325 = vmatprep.subr.bf16.mxu0 0
    %326 = vmatpush2.bf16.msra.mxu0 0
    %327 = vmatprep.subr.bf16.mxu0 0
    %328 = vmatpush2.bf16.msra.mxu0 0
    %329 = vmatprep.mubr.bf16.mxu0 0
    %330 = vmatmul.mubr.bf16.gmra.mxu0 %v292
    %v331 = vpop.f32.mrf.mxu0
    %v332 = vadd.f32 %v272, %v331
    %v333 = vpop.f32.mrf.mxu0
    %v334 = vpop.f32.mrf.mxu0
    %v335 = vadd.f32 %v272, %v334
    %v336 = vpop.f32.mrf.mxu0
    %337 = vmatprep.mubr.bf16.mxu0 0
    %338 = vmatmul.mubr.bf16.gmra.mxu0 %v295
    %v339 = vpop.f32.mrf.mxu0
    %v340 = vadd.f32 %v272, %v339
    %v341 = vpop.f32.mrf.mxu0
    %v342 = vpop.f32.mrf.mxu0
    %v343 = vadd.f32 %v272, %v342
    %v344 = vpop.f32.mrf.mxu0
    %345 = vdwg.mxu0
    %v346 = vld [vmem:[#allocation7 + $0x28] sm:$0xf]
    %v347 = vld [vmem:[#allocation7 + $0x2c] sm:$0xf]
    %v348 = vld [vmem:[#allocation7 + $0x30] sm:$0xf]
    %v349 = vld [vmem:[#allocation7 + $0x34] sm:$0xf]
    %v350 = vld [vmem:[#allocation7 + $0x38] sm:$0xf]
    %v351 = vld [vmem:[#allocation7 + $0x3c] sm:$0xf]
    %v352 = vld [vmem:[#allocation8 + $0x8] sm:$0x1]
    %v353 = vlaneseq
    %v354 = vshrl.u32 %v353, 7
    %v355 = vsub.s32 0, %v354
    %v356 = vrot.slane %v352, %v355
    %v363 = vunpack.c.l.b16 %v346
    %v364 = vunpack.c.l.b16 %v347
    %v365 = vunpack.c.l.b16 %v348
    %v366 = vunpack.c.l.b16 %v349
    %v367 = vunpack.c.l.b16 %v350
    %v368 = vunpack.c.l.b16 %v351
    %v369 = vpack.c.b16 %v364, %v363
    %v370 = vpack.c.b16 %v366, %v365
    %v371 = vpack.c.b16 %v368, %v367
    %375 = vmatprep.subr.bf16.mxu0 0
    %376 = vmatpush1.bf16.msra.mxu0 0
    %377 = vmatprep.subr.bf16.mxu0 0
    %378 = vmatpush1.bf16.msra.mxu0 0
    %379 = vmatprep.subr.bf16.mxu0 0
    %380 = vmatpush1.bf16.msra.mxu0 0
    %381 = vmatprep.subr.bf16.mxu0 0
    %382 = vmatpush1.bf16.msra.mxu0 0
    %383 = vmatprep.subr.bf16.mxu0 0
    %384 = vmatpush1.bf16.msra.mxu0 0
    %385 = vmatprep.subr.bf16.mxu0 0
    %386 = vmatpush1.bf16.msra.mxu0 %v371
    %387 = vmatprep.subr.bf16.mxu0 0
    %388 = vmatpush1.bf16.msra.mxu0 %v370
    %389 = vmatprep.subr.bf16.mxu0 0
    %390 = vmatpush1.bf16.msra.mxu0 %v369
    %391 = vmatprep.subr.bf16.mxu0 0
    %392 = vmatpush2.bf16.msra.mxu0 0
    %393 = vmatprep.subr.bf16.mxu0 0
    %394 = vmatpush2.bf16.msra.mxu0 0
    %395 = vmatprep.subr.bf16.mxu0 0
    %396 = vmatpush2.bf16.msra.mxu0 0
    %397 = vmatprep.subr.bf16.mxu0 0
    %398 = vmatpush2.bf16.msra.mxu0 0
    %399 = vmatprep.subr.bf16.mxu0 0
    %400 = vmatpush2.bf16.msra.mxu0 0
    %401 = vmatprep.subr.bf16.mxu0 0
    %402 = vmatpush2.bf16.msra.mxu0 0
    %403 = vmatprep.subr.bf16.mxu0 0
    %404 = vmatpush2.bf16.msra.mxu0 0
    %405 = vmatprep.subr.bf16.mxu0 0
    %406 = vmatpush2.bf16.msra.mxu0 0
    %407 = vmatprep.mubr.bf16.mxu0 0
    %408 = vmatmul.mubr.bf16.gmra.mxu0 %v292
    %v409 = vpop.f32.mrf.mxu0
    %v410 = vadd.f32 %v356, %v409
    %v411 = vpop.f32.mrf.mxu0
    %v412 = vpop.f32.mrf.mxu0
    %v413 = vadd.f32 %v356, %v412
    %v414 = vpop.f32.mrf.mxu0
    %415 = vmatprep.mubr.bf16.mxu0 0
    %416 = vmatmul.mubr.bf16.gmra.mxu0 %v295
    %v417 = vpop.f32.mrf.mxu0
    %v418 = vadd.f32 %v356, %v417
    %v419 = vpop.f32.mrf.mxu0
    %v420 = vpop.f32.mrf.mxu0
    %v421 = vadd.f32 %v356, %v420
    %v422 = vpop.f32.mrf.mxu0
    %423 = vdwg.mxu0
    %v424 = vld [vmem:[#allocation7 + $0x90] sm:$0xf]
    %v425 = vld [vmem:[#allocation7 + $0x94] sm:$0xf]
    %v426 = vld [vmem:[#allocation7 + $0x98] sm:$0xf]
    %v427 = vld [vmem:[#allocation7 + $0x9c] sm:$0xf]
    %v428 = vld [vmem:[#allocation7 + $0xa0] sm:$0xf]
    %v429 = vld [vmem:[#allocation7 + $0xa4] sm:$0xf]
    %v430 = vld [vmem:[#allocation7 + $0xa8] sm:$0xf]
    %v431 = vld [vmem:[#allocation7 + $0xac] sm:$0xf]
    %v432 = vld [vmem:[#allocation7 + $0xb0] sm:$0xf]
    %v433 = vld [vmem:[#allocation7 + $0xb4] sm:$0xf]
    %v434 = vld [vmem:[#allocation7 + $0xb8] sm:$0xf]
    %v435 = vld [vmem:[#allocation7 + $0xbc] sm:$0xf]
    %v436 = vld [vmem:[#allocation7 + $0xc0] sm:$0xf]
    %v437 = vld [vmem:[#allocation7 + $0xc4] sm:$0xf]
    %v438 = vld [vmem:[#allocation7 + $0xc8] sm:$0xf]
    %v439 = vld [vmem:[#allocation7 + $0xcc] sm:$0xf]
    %v440 = vpack.c.bf16 %v256, %v256
    %v441 = vpack.c.bf16 %v335, %v332
    %v442 = vpack.c.bf16 %v413, %v410
    %v451 = vunpack.c.l.b16 %v424
    %v452 = vunpack.c.l.b16 %v425
    %v453 = vunpack.c.l.b16 %v426
    %v454 = vunpack.c.l.b16 %v427
    %v455 = vunpack.c.l.b16 %v428
    %v456 = vunpack.c.l.b16 %v429
    %v457 = vunpack.c.l.b16 %v430
    %v458 = vunpack.c.l.b16 %v431
    %v459 = vpack.c.b16 %v452, %v451
    %v460 = vpack.c.b16 %v454, %v453
    %v461 = vpack.c.b16 %v456, %v455
    %v462 = vpack.c.b16 %v458, %v457
    %v467 = vmul.bf16 %v441, %v459
    %v468 = vmul.bf16 %v441, %v460
    %v469 = vmul.bf16 %v441, %v461
    %v470 = vmul.bf16 %v441, %v462
    %v479 = vunpack.c.l.b16 %v432
    %v480 = vunpack.c.l.b16 %v433
    %v481 = vunpack.c.l.b16 %v434
    %v482 = vunpack.c.l.b16 %v435
    %v483 = vunpack.c.l.b16 %v436
    %v484 = vunpack.c.l.b16 %v437
    %v485 = vunpack.c.l.b16 %v438
    %v486 = vunpack.c.l.b16 %v439
    %v487 = vpack.c.b16 %v480, %v479
    %v488 = vpack.c.b16 %v482, %v481
    %v489 = vpack.c.b16 %v484, %v483
    %v490 = vpack.c.b16 %v486, %v485
    %v495 = vmul.bf16 %v442, %v487
    %v496 = vmul.bf16 %v442, %v488
    %v497 = vmul.bf16 %v442, %v489
    %v498 = vmul.bf16 %v442, %v490
    %vm499 = vcmask 523264
    %v501 = vsel %vm499, %v440, 0
    %v504 = vsel %vm499, %v467, 0
    %v507 = vsel %vm499, %v468, 0
    %v510 = vsel %vm499, %v469, 0
    %v513 = vsel %vm499, %v470, 0
    %515 = vmatprep.subr.bf16.mxu0 0
    %516 = vmatpush1.bf16.xpose.msra.mxu0 0
    %517 = vmatprep.subr.bf16.mxu0 0
    %518 = vmatpush1.bf16.xpose.msra.mxu0 0
    %519 = vmatprep.subr.bf16.mxu0 0
    %520 = vmatpush1.bf16.xpose.msra.mxu0 0
    %521 = vmatprep.subr.bf16.mxu0 0
    %522 = vmatpush1.bf16.xpose.msra.mxu0 0
    %523 = vmatprep.subr.bf16.mxu0 0
    %524 = vmatpush1.bf16.xpose.msra.mxu0 %v513
    %525 = vmatprep.subr.bf16.mxu0 0
    %526 = vmatpush1.bf16.xpose.msra.mxu0 %v510
    %527 = vmatprep.subr.bf16.mxu0 0
    %528 = vmatpush1.bf16.xpose.msra.mxu0 %v507
    %529 = vmatprep.subr.bf16.mxu0 0
    %530 = vmatpush1.bf16.xpose.msra.mxu0 %v504
    %531 = vmatprep.subr.bf16.mxu0 0
    %532 = vmatpush2.bf16.xpose.msra.mxu0 0
    %533 = vmatprep.subr.bf16.mxu0 0
    %534 = vmatpush2.bf16.xpose.msra.mxu0 0
    %535 = vmatprep.subr.bf16.mxu0 0
    %536 = vmatpush2.bf16.xpose.msra.mxu0 0
    %537 = vmatprep.subr.bf16.mxu0 0
    %538 = vmatpush2.bf16.xpose.msra.mxu0 0
    %539 = vmatprep.subr.bf16.mxu0 0
    %540 = vmatpush2.bf16.xpose.msra.mxu0 0
    %541 = vmatprep.subr.bf16.mxu0 0
    %542 = vmatpush2.bf16.xpose.msra.mxu0 0
    %543 = vmatprep.subr.bf16.mxu0 0
    %544 = vmatpush2.bf16.xpose.msra.mxu0 0
    %545 = vmatprep.subr.bf16.mxu0 0
    %546 = vmatpush2.bf16.xpose.msra.mxu0 0
    %547 = vmatprep.mubr.bf16.mxu0 0
    %548 = vmatmul.mubr.bf16.gmra.mxu0 %v501
    %v549 = vpop.f32.mrf.mxu0
    %v550 = vadd.f32 0.0, %v549
    %v551 = vpop.f32.mrf.mxu0
    %v552 = vpop.f32.mrf.mxu0
    %v553 = vpop.f32.mrf.mxu0
    %554 = vdwg.mxu0
    %v555 = vsel %vm499, %v550, -inf
    %556 = vmax.xlane.f32.xlu0 %v555
    %v557 = vpop.xlane.xlu0 %556
    %v558 = vsub.f32 %v550, %v557
    %v559 = vmul.f32 %v558, 1.442695
    %v560 = vpow.pop %v559
    %v561 = vpack.c.bf16 %v560, %v560
    %v563 = vsel %vm499, %v561, 0
    %565 = vmatprep.subr.bf16.mxu0 0
    %566 = vmatpush1.bf16.msra.mxu0 0
    %567 = vmatprep.subr.bf16.mxu0 0
    %568 = vmatpush1.bf16.msra.mxu0 0
    %569 = vmatprep.subr.bf16.mxu0 0
    %570 = vmatpush1.bf16.msra.mxu0 0
    %571 = vmatprep.subr.bf16.mxu0 0
    %572 = vmatpush1.bf16.msra.mxu0 0
    %573 = vmatprep.subr.bf16.mxu0 0
    %574 = vmatpush1.bf16.msra.mxu0 %v498
    %575 = vmatprep.subr.bf16.mxu0 0
    %576 = vmatpush1.bf16.msra.mxu0 %v497
    %577 = vmatprep.subr.bf16.mxu0 0
    %578 = vmatpush1.bf16.msra.mxu0 %v496
    %579 = vmatprep.subr.bf16.mxu0 0
    %580 = vmatpush1.bf16.msra.mxu0 %v495
    %581 = vmatprep.subr.bf16.mxu0 0
    %582 = vmatpush2.bf16.msra.mxu0 0
    %583 = vmatprep.subr.bf16.mxu0 0
    %584 = vmatpush2.bf16.msra.mxu0 0
    %585 = vmatprep.subr.bf16.mxu0 0
    %586 = vmatpush2.bf16.msra.mxu0 0
    %587 = vmatprep.subr.bf16.mxu0 0
    %588 = vmatpush2.bf16.msra.mxu0 0
    %589 = vmatprep.subr.bf16.mxu0 0
    %590 = vmatpush2.bf16.msra.mxu0 0
    %591 = vmatprep.subr.bf16.mxu0 0
    %592 = vmatpush2.bf16.msra.mxu0 0
    %593 = vmatprep.subr.bf16.mxu0 0
    %594 = vmatpush2.bf16.msra.mxu0 0
    %595 = vmatprep.subr.bf16.mxu0 0
    %596 = vmatpush2.bf16.msra.mxu0 0
    %597 = vmatprep.mubr.bf16.mxu0 0
    %598 = vmatmul.mubr.bf16.gmra.mxu0 %v563
    %v599 = vpop.f32.mrf.mxu0
    %v600 = vadd.f32 0.0, %v599
    %v601 = vpop.f32.mrf.mxu0
    %v602 = vpop.f32.mrf.mxu0
    %v603 = vpop.f32.mrf.mxu0
    %604 = vdwg.mxu0
    %605 = vmatprep.subr.bf16.mxu0 0
    %606 = vmatpush1.bf16.msra.mxu0 0
    %607 = vmatprep.subr.bf16.mxu0 0
    %608 = vmatpush1.bf16.msra.mxu0 0
    %609 = vmatprep.subr.bf16.mxu0 0
    %610 = vmatpush1.bf16.msra.mxu0 0
    %611 = vmatprep.subr.bf16.mxu0 0
    %612 = vmatpush1.bf16.msra.mxu0 0
    %613 = vmatprep.subr.bf16.mxu0 0
    %614 = vmatpush1.bf16.msra.mxu0 %v490
    %615 = vmatprep.subr.bf16.mxu0 0
    %616 = vmatpush1.bf16.msra.mxu0 %v489
    %617 = vmatprep.subr.bf16.mxu0 0
    %618 = vmatpush1.bf16.msra.mxu0 %v488
    %619 = vmatprep.subr.bf16.mxu0 0
    %620 = vmatpush1.bf16.msra.mxu0 %v487
    %621 = vmatprep.subr.bf16.mxu0 0
    %622 = vmatpush2.bf16.msra.mxu0 0
    %623 = vmatprep.subr.bf16.mxu0 0
    %624 = vmatpush2.bf16.msra.mxu0 0
    %625 = vmatprep.subr.bf16.mxu0 0
    %626 = vmatpush2.bf16.msra.mxu0 0
    %627 = vmatprep.subr.bf16.mxu0 0
    %628 = vmatpush2.bf16.msra.mxu0 0
    %629 = vmatprep.subr.bf16.mxu0 0
    %630 = vmatpush2.bf16.msra.mxu0 0
    %631 = vmatprep.subr.bf16.mxu0 0
    %632 = vmatpush2.bf16.msra.mxu0 0
    %633 = vmatprep.subr.bf16.mxu0 0
    %634 = vmatpush2.bf16.msra.mxu0 0
    %635 = vmatprep.subr.bf16.mxu0 0
    %636 = vmatpush2.bf16.msra.mxu0 0
    %637 = vmatprep.mubr.bf16.mxu0 0
    %638 = vmatmul.mubr.bf16.gmra.mxu0 %v563
    %v639 = vpop.f32.mrf.mxu0
    %v640 = vadd.f32 0.0, %v639
    %v641 = vpop.f32.mrf.mxu0
    %v642 = vpop.f32.mrf.mxu0
    %v643 = vpop.f32.mrf.mxu0
    %644 = vdwg.mxu0
    %v645 = vrcp.pop %v640
    %v646 = vmul.f32 %v600, %v645
    %v647 = vpack.c.bf16 %v259, %v259
    %v648 = vpack.c.bf16 %v343, %v340
    %v649 = vpack.c.bf16 %v421, %v418
    %v650 = vmul.bf16 %v648, %v459
    %v651 = vmul.bf16 %v648, %v460
    %v652 = vmul.bf16 %v648, %v461
    %v653 = vmul.bf16 %v648, %v462
    %v654 = vmul.bf16 %v649, %v487
    %v655 = vmul.bf16 %v649, %v488
    %v656 = vmul.bf16 %v649, %v489
    %v657 = vmul.bf16 %v649, %v490
    %v659 = vsel %vm499, %v647, 0
    %v662 = vsel %vm499, %v650, 0
    %v665 = vsel %vm499, %v651, 0
    %v668 = vsel %vm499, %v652, 0
    %v671 = vsel %vm499, %v653, 0
    %673 = vmatprep.subr.bf16.mxu0 0
    %674 = vmatpush1.bf16.xpose.msra.mxu0 0
    %675 = vmatprep.subr.bf16.mxu0 0
    %676 = vmatpush1.bf16.xpose.msra.mxu0 0
    %677 = vmatprep.subr.bf16.mxu0 0
    %678 = vmatpush1.bf16.xpose.msra.mxu0 0
    %679 = vmatprep.subr.bf16.mxu0 0
    %680 = vmatpush1.bf16.xpose.msra.mxu0 0
    %681 = vmatprep.subr.bf16.mxu0 0
    %682 = vmatpush1.bf16.xpose.msra.mxu0 %v671
    %683 = vmatprep.subr.bf16.mxu0 0
    %684 = vmatpush1.bf16.xpose.msra.mxu0 %v668
    %685 = vmatprep.subr.bf16.mxu0 0
    %686 = vmatpush1.bf16.xpose.msra.mxu0 %v665
    %687 = vmatprep.subr.bf16.mxu0 0
    %688 = vmatpush1.bf16.xpose.msra.mxu0 %v662
    %689 = vmatprep.subr.bf16.mxu0 0
    %690 = vmatpush2.bf16.xpose.msra.mxu0 0
    %691 = vmatprep.subr.bf16.mxu0 0
    %692 = vmatpush2.bf16.xpose.msra.mxu0 0
    %693 = vmatprep.subr.bf16.mxu0 0
    %694 = vmatpush2.bf16.xpose.msra.mxu0 0
    %695 = vmatprep.subr.bf16.mxu0 0
    %696 = vmatpush2.bf16.xpose.msra.mxu0 0
    %697 = vmatprep.subr.bf16.mxu0 0
    %698 = vmatpush2.bf16.xpose.msra.mxu0 0
    %699 = vmatprep.subr.bf16.mxu0 0
    %700 = vmatpush2.bf16.xpose.msra.mxu0 0
    %701 = vmatprep.subr.bf16.mxu0 0
    %702 = vmatpush2.bf16.xpose.msra.mxu0 0
    %703 = vmatprep.subr.bf16.mxu0 0
    %704 = vmatpush2.bf16.xpose.msra.mxu0 0
    %705 = vmatprep.mubr.bf16.mxu0 0
    %706 = vmatmul.mubr.bf16.gmra.mxu0 %v659
    %v707 = vpop.f32.mrf.mxu0
    %v708 = vadd.f32 0.0, %v707
    %v709 = vpop.f32.mrf.mxu0
    %v710 = vpop.f32.mrf.mxu0
    %v711 = vpop.f32.mrf.mxu0
    %712 = vdwg.mxu0
    %v713 = vsel %vm499, %v708, -inf
    %714 = vmax.xlane.f32.xlu0 %v713
    %v715 = vpop.xlane.xlu0 %714
    %v716 = vsub.f32 %v708, %v715
    %v717 = vmul.f32 %v716, 1.442695
    %v718 = vpow.pop %v717
    %v719 = vpack.c.bf16 %v718, %v718
    %v721 = vsel %vm499, %v719, 0
    %723 = vmatprep.subr.bf16.mxu0 0
    %724 = vmatpush1.bf16.msra.mxu0 0
    %725 = vmatprep.subr.bf16.mxu0 0
    %726 = vmatpush1.bf16.msra.mxu0 0
    %727 = vmatprep.subr.bf16.mxu0 0
    %728 = vmatpush1.bf16.msra.mxu0 0
    %729 = vmatprep.subr.bf16.mxu0 0
    %730 = vmatpush1.bf16.msra.mxu0 0
    %731 = vmatprep.subr.bf16.mxu0 0
    %732 = vmatpush1.bf16.msra.mxu0 %v657
    %733 = vmatprep.subr.bf16.mxu0 0
    %734 = vmatpush1.bf16.msra.mxu0 %v656
    %735 = vmatprep.subr.bf16.mxu0 0
    %736 = vmatpush1.bf16.msra.mxu0 %v655
    %737 = vmatprep.subr.bf16.mxu0 0
    %738 = vmatpush1.bf16.msra.mxu0 %v654
    %739 = vmatprep.subr.bf16.mxu0 0
    %740 = vmatpush2.bf16.msra.mxu0 0
    %741 = vmatprep.subr.bf16.mxu0 0
    %742 = vmatpush2.bf16.msra.mxu0 0
    %743 = vmatprep.subr.bf16.mxu0 0
    %744 = vmatpush2.bf16.msra.mxu0 0
    %745 = vmatprep.subr.bf16.mxu0 0
    %746 = vmatpush2.bf16.msra.mxu0 0
    %747 = vmatprep.subr.bf16.mxu0 0
    %748 = vmatpush2.bf16.msra.mxu0 0
    %749 = vmatprep.subr.bf16.mxu0 0
    %750 = vmatpush2.bf16.msra.mxu0 0
    %751 = vmatprep.subr.bf16.mxu0 0
    %752 = vmatpush2.bf16.msra.mxu0 0
    %753 = vmatprep.subr.bf16.mxu0 0
    %754 = vmatpush2.bf16.msra.mxu0 0
    %755 = vmatprep.mubr.bf16.mxu0 0
    %756 = vmatmul.mubr.bf16.gmra.mxu0 %v721
    %v757 = vpop.f32.mrf.mxu0
    %v758 = vadd.f32 0.0, %v757
    %v759 = vpop.f32.mrf.mxu0
    %v760 = vpop.f32.mrf.mxu0
    %v761 = vpop.f32.mrf.mxu0
    %762 = vdwg.mxu0
    %763 = vmatprep.subr.bf16.mxu0 0
    %764 = vmatpush1.bf16.msra.mxu0 0
    %765 = vmatprep.subr.bf16.mxu0 0
    %766 = vmatpush1.bf16.msra.mxu0 0
    %767 = vmatprep.subr.bf16.mxu0 0
    %768 = vmatpush1.bf16.msra.mxu0 0
    %769 = vmatprep.subr.bf16.mxu0 0
    %770 = vmatpush1.bf16.msra.mxu0 0
    %771 = vmatprep.subr.bf16.mxu0 0
    %772 = vmatpush1.bf16.msra.mxu0 %v490
    %773 = vmatprep.subr.bf16.mxu0 0
    %774 = vmatpush1.bf16.msra.mxu0 %v489
    %775 = vmatprep.subr.bf16.mxu0 0
    %776 = vmatpush1.bf16.msra.mxu0 %v488
    %777 = vmatprep.subr.bf16.mxu0 0
    %778 = vmatpush1.bf16.msra.mxu0 %v487
    %779 = vmatprep.subr.bf16.mxu0 0
    %780 = vmatpush2.bf16.msra.mxu0 0
    %781 = vmatprep.subr.bf16.mxu0 0
    %782 = vmatpush2.bf16.msra.mxu0 0
    %783 = vmatprep.subr.bf16.mxu0 0
    %784 = vmatpush2.bf16.msra.mxu0 0
    %785 = vmatprep.subr.bf16.mxu0 0
    %786 = vmatpush2.bf16.msra.mxu0 0
    %787 = vmatprep.subr.bf16.mxu0 0
    %788 = vmatpush2.bf16.msra.mxu0 0
    %789 = vmatprep.subr.bf16.mxu0 0
    %790 = vmatpush2.bf16.msra.mxu0 0
    %791 = vmatprep.subr.bf16.mxu0 0
    %792 = vmatpush2.bf16.msra.mxu0 0
    %793 = vmatprep.subr.bf16.mxu0 0
    %794 = vmatpush2.bf16.msra.mxu0 0
    %795 = vmatprep.mubr.bf16.mxu0 0
    %796 = vmatmul.mubr.bf16.gmra.mxu0 %v721
    %v797 = vpop.f32.mrf.mxu0
    %v798 = vadd.f32 0.0, %v797
    %v799 = vpop.f32.mrf.mxu0
    %v800 = vpop.f32.mrf.mxu0
    %v801 = vpop.f32.mrf.mxu0
    %802 = vdwg.mxu0
    %v803 = vrcp.pop %v798
    %v804 = vmul.f32 %v758, %v803
    %v805 = vpack.c.bf16 %v804, %v646
    %v806 = vld [vmem:[#allocation7 + $0xd0] sm:$0xf]
    %v807 = vld [vmem:[#allocation7 + $0xd4] sm:$0xf]
    %v808 = vld [vmem:[#allocation7 + $0xd8] sm:$0xf]
    %v809 = vld [vmem:[#allocation7 + $0xdc] sm:$0xf]
    %v810 = vld [vmem:[#allocation7 + $0xe0] sm:$0xf]
    %v811 = vld [vmem:[#allocation7 + $0xe4] sm:$0xf]
    %v812 = vld [vmem:[#allocation7 + $0xe8] sm:$0xf]
    %v813 = vld [vmem:[#allocation7 + $0xec] sm:$0xf]
    %v814 = vld [vmem:[#allocation7 + $0xf0] sm:$0xf]
    %v815 = vld [vmem:[#allocation7 + $0xf4] sm:$0xf]
    %v816 = vld [vmem:[#allocation7 + $0xf8] sm:$0xf]
    %v817 = vld [vmem:[#allocation7 + $0xfc] sm:$0xf]
    %v818 = vld [vmem:[#allocation7 + $0x100] sm:$0xf]
    %v819 = vld [vmem:[#allocation7 + $0x104] sm:$0xf]
    %v820 = vld [vmem:[#allocation7 + $0x108] sm:$0xf]
    %v821 = vld [vmem:[#allocation7 + $0x10c] sm:$0xf]
    %v830 = vunpack.c.l.b16 %v806
    %v831 = vunpack.c.l.b16 %v807
    %v832 = vunpack.c.l.b16 %v808
    %v833 = vunpack.c.l.b16 %v809
    %v834 = vunpack.c.l.b16 %v810
    %v835 = vunpack.c.l.b16 %v811
    %v836 = vunpack.c.l.b16 %v812
    %v837 = vunpack.c.l.b16 %v813
    %v838 = vpack.c.b16 %v831, %v830
    %v839 = vpack.c.b16 %v833, %v832
    %v840 = vpack.c.b16 %v835, %v834
    %v841 = vpack.c.b16 %v837, %v836
    %vm842 = vcmask 130048
    %v844 = vsel %vm842, %v838, 0
    %v847 = vsel %vm842, %v839, 0
    %v850 = vsel %vm842, %v840, 0
    %v853 = vsel %vm842, %v841, 0
    %855 = vmatprep.subr.bf16.mxu0 0
    %856 = vmatpush1.bf16.msra.mxu0 0
    %857 = vmatprep.subr.bf16.mxu0 0
    %858 = vmatpush1.bf16.msra.mxu0 0
    %859 = vmatprep.subr.bf16.mxu0 0
    %860 = vmatpush1.bf16.msra.mxu0 0
    %861 = vmatprep.subr.bf16.mxu0 0
    %862 = vmatpush1.bf16.msra.mxu0 0
    %863 = vmatprep.subr.bf16.mxu0 0
    %864 = vmatpush1.bf16.msra.mxu0 0
    %865 = vmatprep.subr.bf16.mxu0 0
    %866 = vmatpush1.bf16.msra.mxu0 0
    %867 = vmatprep.subr.bf16.mxu0 0
    %868 = vmatpush1.bf16.msra.mxu0 0
    %869 = vmatprep.subr.bf16.mxu0 0
    %870 = vmatpush1.bf16.msra.mxu0 %v805
    %871 = vmatprep.subr.bf16.mxu0 0
    %872 = vmatpush2.bf16.msra.mxu0 0
    %873 = vmatprep.subr.bf16.mxu0 0
    %874 = vmatpush2.bf16.msra.mxu0 0
    %875 = vmatprep.subr.bf16.mxu0 0
    %876 = vmatpush2.bf16.msra.mxu0 0
    %877 = vmatprep.subr.bf16.mxu0 0
    %878 = vmatpush2.bf16.msra.mxu0 0
    %879 = vmatprep.subr.bf16.mxu0 0
    %880 = vmatpush2.bf16.msra.mxu0 0
    %881 = vmatprep.subr.bf16.mxu0 0
    %882 = vmatpush2.bf16.msra.mxu0 0
    %883 = vmatprep.subr.bf16.mxu0 0
    %884 = vmatpush2.bf16.msra.mxu0 0
    %885 = vmatprep.subr.bf16.mxu0 0
    %886 = vmatpush2.bf16.msra.mxu0 0
    %887 = vmatprep.mubr.bf16.mxu0 0
    %888 = vmatmul.mubr.bf16.gmra.mxu0 %v844
    %v889 = vpop.f32.mrf.mxu0
    %v890 = vadd.f32 0.0, %v889
    %v891 = vpop.f32.mrf.mxu0
    %v892 = vpop.f32.mrf.mxu0
    %v893 = vadd.f32 0.0, %v892
    %v894 = vpop.f32.mrf.mxu0
    %895 = vmatprep.mubr.bf16.mxu0 0
    %896 = vmatmul.mubr.bf16.gmra.mxu0 %v847
    %v897 = vpop.f32.mrf.mxu0
    %v898 = vadd.f32 0.0, %v897
    %v899 = vpop.f32.mrf.mxu0
    %v900 = vpop.f32.mrf.mxu0
    %v901 = vadd.f32 0.0, %v900
    %v902 = vpop.f32.mrf.mxu0
    %903 = vmatprep.mubr.bf16.mxu0 0
    %904 = vmatmul.mubr.bf16.gmra.mxu0 %v850
    %v905 = vpop.f32.mrf.mxu0
    %v906 = vadd.f32 0.0, %v905
    %v907 = vpop.f32.mrf.mxu0
    %v908 = vpop.f32.mrf.mxu0
    %v909 = vadd.f32 0.0, %v908
    %v910 = vpop.f32.mrf.mxu0
    %911 = vmatprep.mubr.bf16.mxu0 0
    %912 = vmatmul.mubr.bf16.gmra.mxu0 %v853
    %v913 = vpop.f32.mrf.mxu0
    %v914 = vadd.f32 0.0, %v913
    %v915 = vpop.f32.mrf.mxu0
    %v916 = vpop.f32.mrf.mxu0
    %v917 = vadd.f32 0.0, %v916
    %v918 = vpop.f32.mrf.mxu0
    %919 = vdwg.mxu0
    %v920 = vpack.c.bf16 %v893, %v890
    %v921 = vpack.c.bf16 %v901, %v898
    %v922 = vpack.c.bf16 %v909, %v906
    %v923 = vpack.c.bf16 %v917, %v914
    %v932 = vunpack.c.l.b16 %v814
    %v933 = vunpack.c.l.b16 %v815
    %v934 = vunpack.c.l.b16 %v816
    %v935 = vunpack.c.l.b16 %v817
    %v936 = vunpack.c.l.b16 %v818
    %v937 = vunpack.c.l.b16 %v819
    %v938 = vunpack.c.l.b16 %v820
    %v939 = vunpack.c.l.b16 %v821
    %v940 = vpack.c.b16 %v933, %v932
    %v941 = vpack.c.b16 %v935, %v934
    %v942 = vpack.c.b16 %v937, %v936
    %v943 = vpack.c.b16 %v939, %v938
    %v948 = vmul.bf16 %v920, %v940
    %v949 = vmul.bf16 %v921, %v941
    %v950 = vmul.bf16 %v922, %v942
    %v951 = vmul.bf16 %v923, %v943
    %v952 = vld [vmem:[#allocation7 + $0x110] sm:$0xf]
    %v953 = vld [vmem:[#allocation7 + $0x114] sm:$0xf]
    %v954 = vld [vmem:[#allocation7 + $0x118] sm:$0xf]
    %v955 = vld [vmem:[#allocation7 + $0x11c] sm:$0xf]
    %v956 = vld [vmem:[#allocation7 + $0x120] sm:$0xf]
    %v957 = vld [vmem:[#allocation7 + $0x124] sm:$0xf]
    %v958 = vld [vmem:[#allocation7 + $0x128] sm:$0xf]
    %v959 = vld [vmem:[#allocation7 + $0x12c] sm:$0xf]
    %v960 = vld [vmem:[#allocation7 + $0x130] sm:$0xf]
    %v961 = vld [vmem:[#allocation7 + $0x134] sm:$0xf]
    %v962 = vld [vmem:[#allocation7 + $0x138] sm:$0xf]
    %v963 = vld [vmem:[#allocation7 + $0x13c] sm:$0xf]
    %v964 = vld [vmem:[#allocation7 + $0x140] sm:$0xf]
    %v965 = vld [vmem:[#allocation7 + $0x144] sm:$0xf]
    %v966 = vld [vmem:[#allocation7 + $0x148] sm:$0xf]
    %v967 = vld [vmem:[#allocation7 + $0x14c] sm:$0xf]
    %v968 = vld [vmem:[#allocation8 + $0x9] sm:$0x1]
    %v973 = vunpack.c.l.b16 %v952
    %v974 = vunpack.c.l.b16 %v953
    %v975 = vunpack.c.l.b16 %v954
    %v976 = vunpack.c.l.b16 %v955
    %v977 = vpack.c.b16 %v974, %v973
    %v978 = vpack.c.b16 %v976, %v975
    %v982 = vsel %vm82, %v948, 0
    %984 = vmatprep.subr.bf16.mxu0 0
    %985 = vmatpush1.bf16.msra.mxu0 0
    %986 = vmatprep.subr.bf16.mxu0 0
    %987 = vmatpush1.bf16.msra.mxu0 0
    %988 = vmatprep.subr.bf16.mxu0 0
    %989 = vmatpush1.bf16.msra.mxu0 0
    %990 = vmatprep.subr.bf16.mxu0 0
    %991 = vmatpush1.bf16.msra.mxu0 0
    %992 = vmatprep.subr.bf16.mxu0 0
    %993 = vmatpush1.bf16.msra.mxu0 0
    %994 = vmatprep.subr.bf16.mxu0 0
    %995 = vmatpush1.bf16.msra.mxu0 0
    %996 = vmatprep.subr.bf16.mxu0 0
    %997 = vmatpush1.bf16.msra.mxu0 %v978
    %998 = vmatprep.subr.bf16.mxu0 0
    %999 = vmatpush1.bf16.msra.mxu0 %v977
    %1000 = vmatprep.subr.bf16.mxu0 0
    %1001 = vmatpush2.bf16.msra.mxu0 0
    %1002 = vmatprep.subr.bf16.mxu0 0
    %1003 = vmatpush2.bf16.msra.mxu0 0
    %1004 = vmatprep.subr.bf16.mxu0 0
    %1005 = vmatpush2.bf16.msra.mxu0 0
    %1006 = vmatprep.subr.bf16.mxu0 0
    %1007 = vmatpush2.bf16.msra.mxu0 0
    %1008 = vmatprep.subr.bf16.mxu0 0
    %1009 = vmatpush2.bf16.msra.mxu0 0
    %1010 = vmatprep.subr.bf16.mxu0 0
    %1011 = vmatpush2.bf16.msra.mxu0 0
    %1012 = vmatprep.subr.bf16.mxu0 0
    %1013 = vmatpush2.bf16.msra.mxu0 0
    %1014 = vmatprep.subr.bf16.mxu0 0
    %1015 = vmatpush2.bf16.msra.mxu0 0
    %1016 = vmatprep.mubr.bf16.mxu0 0
    %1017 = vmatmul.mubr.bf16.gmra.mxu0 %v982
    %v1018 = vpop.f32.mrf.mxu0
    %v1019 = vadd.f32 0.0, %v1018
    %v1020 = vpop.f32.mrf.mxu0
    %v1021 = vpop.f32.mrf.mxu0
    %v1022 = vadd.f32 0.0, %v1021
    %v1023 = vpop.f32.mrf.mxu0
    %1024 = vdwg.mxu0
    %v1025 = vlaneseq
    %v1026 = vshrl.u32 %v1025, 7
    %v1027 = vsub.s32 0, %v1026
    %v1028 = vrot.slane %v968, %v1027
    %v1029 = vadd.f32 %v1028, %v1019
    %v1030 = vadd.f32 %v1028, %v1022
    %v1035 = vunpack.c.l.b16 %v956
    %v1036 = vunpack.c.l.b16 %v957
    %v1037 = vunpack.c.l.b16 %v958
    %v1038 = vunpack.c.l.b16 %v959
    %v1039 = vpack.c.b16 %v1036, %v1035
    %v1040 = vpack.c.b16 %v1038, %v1037
    %v1044 = vsel %vm82, %v949, 0
    %1046 = vmatprep.subr.bf16.mxu0 0
    %1047 = vmatpush1.bf16.msra.mxu0 0
    %1048 = vmatprep.subr.bf16.mxu0 0
    %1049 = vmatpush1.bf16.msra.mxu0 0
    %1050 = vmatprep.subr.bf16.mxu0 0
    %1051 = vmatpush1.bf16.msra.mxu0 0
    %1052 = vmatprep.subr.bf16.mxu0 0
    %1053 = vmatpush1.bf16.msra.mxu0 0
    %1054 = vmatprep.subr.bf16.mxu0 0
    %1055 = vmatpush1.bf16.msra.mxu0 0
    %1056 = vmatprep.subr.bf16.mxu0 0
    %1057 = vmatpush1.bf16.msra.mxu0 0
    %1058 = vmatprep.subr.bf16.mxu0 0
    %1059 = vmatpush1.bf16.msra.mxu0 %v1040
    %1060 = vmatprep.subr.bf16.mxu0 0
    %1061 = vmatpush1.bf16.msra.mxu0 %v1039
    %1062 = vmatprep.subr.bf16.mxu0 0
    %1063 = vmatpush2.bf16.msra.mxu0 0
    %1064 = vmatprep.subr.bf16.mxu0 0
    %1065 = vmatpush2.bf16.msra.mxu0 0
    %1066 = vmatprep.subr.bf16.mxu0 0
    %1067 = vmatpush2.bf16.msra.mxu0 0
    %1068 = vmatprep.subr.bf16.mxu0 0
    %1069 = vmatpush2.bf16.msra.mxu0 0
    %1070 = vmatprep.subr.bf16.mxu0 0
    %1071 = vmatpush2.bf16.msra.mxu0 0
    %1072 = vmatprep.subr.bf16.mxu0 0
    %1073 = vmatpush2.bf16.msra.mxu0 0
    %1074 = vmatprep.subr.bf16.mxu0 0
    %1075 = vmatpush2.bf16.msra.mxu0 0
    %1076 = vmatprep.subr.bf16.mxu0 0
    %1077 = vmatpush2.bf16.msra.mxu0 0
    %1078 = vmatprep.mubr.bf16.mxu0 0
    %1079 = vmatmul.mubr.bf16.gmra.mxu0 %v1044
    %v1080 = vpop.f32.mrf.mxu0
    %v1081 = vadd.f32 0.0, %v1080
    %v1082 = vpop.f32.mrf.mxu0
    %v1083 = vpop.f32.mrf.mxu0
    %v1084 = vadd.f32 0.0, %v1083
    %v1085 = vpop.f32.mrf.mxu0
    %1086 = vdwg.mxu0
    %v1087 = vadd.f32 %v1029, %v1081
    %v1088 = vadd.f32 %v1030, %v1084
    %v1093 = vunpack.c.l.b16 %v960
    %v1094 = vunpack.c.l.b16 %v961
    %v1095 = vunpack.c.l.b16 %v962
    %v1096 = vunpack.c.l.b16 %v963
    %v1097 = vpack.c.b16 %v1094, %v1093
    %v1098 = vpack.c.b16 %v1096, %v1095
    %v1102 = vsel %vm82, %v950, 0
    %1104 = vmatprep.subr.bf16.mxu0 0
    %1105 = vmatpush1.bf16.msra.mxu0 0
    %1106 = vmatprep.subr.bf16.mxu0 0
    %1107 = vmatpush1.bf16.msra.mxu0 0
    %1108 = vmatprep.subr.bf16.mxu0 0
    %1109 = vmatpush1.bf16.msra.mxu0 0
    %1110 = vmatprep.subr.bf16.mxu0 0
    %1111 = vmatpush1.bf16.msra.mxu0 0
    %1112 = vmatprep.subr.bf16.mxu0 0
    %1113 = vmatpush1.bf16.msra.mxu0 0
    %1114 = vmatprep.subr.bf16.mxu0 0
    %1115 = vmatpush1.bf16.msra.mxu0 0
    %1116 = vmatprep.subr.bf16.mxu0 0
    %1117 = vmatpush1.bf16.msra.mxu0 %v1098
    %1118 = vmatprep.subr.bf16.mxu0 0
    %1119 = vmatpush1.bf16.msra.mxu0 %v1097
    %1120 = vmatprep.subr.bf16.mxu0 0
    %1121 = vmatpush2.bf16.msra.mxu0 0
    %1122 = vmatprep.subr.bf16.mxu0 0
    %1123 = vmatpush2.bf16.msra.mxu0 0
    %1124 = vmatprep.subr.bf16.mxu0 0
    %1125 = vmatpush2.bf16.msra.mxu0 0
    %1126 = vmatprep.subr.bf16.mxu0 0
    %1127 = vmatpush2.bf16.msra.mxu0 0
    %1128 = vmatprep.subr.bf16.mxu0 0
    %1129 = vmatpush2.bf16.msra.mxu0 0
    %1130 = vmatprep.subr.bf16.mxu0 0
    %1131 = vmatpush2.bf16.msra.mxu0 0
    %1132 = vmatprep.subr.bf16.mxu0 0
    %1133 = vmatpush2.bf16.msra.mxu0 0
    %1134 = vmatprep.subr.bf16.mxu0 0
    %1135 = vmatpush2.bf16.msra.mxu0 0
    %1136 = vmatprep.mubr.bf16.mxu0 0
    %1137 = vmatmul.mubr.bf16.gmra.mxu0 %v1102
    %v1138 = vpop.f32.mrf.mxu0
    %v1139 = vadd.f32 0.0, %v1138
    %v1140 = vpop.f32.mrf.mxu0
    %v1141 = vpop.f32.mrf.mxu0
    %v1142 = vadd.f32 0.0, %v1141
    %v1143 = vpop.f32.mrf.mxu0
    %1144 = vdwg.mxu0
    %v1145 = vadd.f32 %v1087, %v1139
    %v1146 = vadd.f32 %v1088, %v1142
    %v1151 = vunpack.c.l.b16 %v964
    %v1152 = vunpack.c.l.b16 %v965
    %v1153 = vunpack.c.l.b16 %v966
    %v1154 = vunpack.c.l.b16 %v967
    %v1155 = vpack.c.b16 %v1152, %v1151
    %v1156 = vpack.c.b16 %v1154, %v1153
    %v1160 = vsel %vm82, %v951, 0
    %1162 = vmatprep.subr.bf16.mxu0 0
    %1163 = vmatpush1.bf16.msra.mxu0 0
    %1164 = vmatprep.subr.bf16.mxu0 0
    %1165 = vmatpush1.bf16.msra.mxu0 0
    %1166 = vmatprep.subr.bf16.mxu0 0
    %1167 = vmatpush1.bf16.msra.mxu0 0
    %1168 = vmatprep.subr.bf16.mxu0 0
    %1169 = vmatpush1.bf16.msra.mxu0 0
    %1170 = vmatprep.subr.bf16.mxu0 0
    %1171 = vmatpush1.bf16.msra.mxu0 0
    %1172 = vmatprep.subr.bf16.mxu0 0
    %1173 = vmatpush1.bf16.msra.mxu0 0
    %1174 = vmatprep.subr.bf16.mxu0 0
    %1175 = vmatpush1.bf16.msra.mxu0 %v1156
    %1176 = vmatprep.subr.bf16.mxu0 0
    %1177 = vmatpush1.bf16.msra.mxu0 %v1155
    %1178 = vmatprep.subr.bf16.mxu0 0
    %1179 = vmatpush2.bf16.msra.mxu0 0
    %1180 = vmatprep.subr.bf16.mxu0 0
    %1181 = vmatpush2.bf16.msra.mxu0 0
    %1182 = vmatprep.subr.bf16.mxu0 0
    %1183 = vmatpush2.bf16.msra.mxu0 0
    %1184 = vmatprep.subr.bf16.mxu0 0
    %1185 = vmatpush2.bf16.msra.mxu0 0
    %1186 = vmatprep.subr.bf16.mxu0 0
    %1187 = vmatpush2.bf16.msra.mxu0 0
    %1188 = vmatprep.subr.bf16.mxu0 0
    %1189 = vmatpush2.bf16.msra.mxu0 0
    %1190 = vmatprep.subr.bf16.mxu0 0
    %1191 = vmatpush2.bf16.msra.mxu0 0
    %1192 = vmatprep.subr.bf16.mxu0 0
    %1193 = vmatpush2.bf16.msra.mxu0 0
    %1194 = vmatprep.mubr.bf16.mxu0 0
    %1195 = vmatmul.mubr.bf16.gmra.mxu0 %v1160
    %v1196 = vpop.f32.mrf.mxu0
    %v1197 = vadd.f32 0.0, %v1196
    %v1198 = vpop.f32.mrf.mxu0
    %v1199 = vpop.f32.mrf.mxu0
    %v1200 = vadd.f32 0.0, %v1199
    %v1201 = vpop.f32.mrf.mxu0
    %1202 = vdwg.mxu0
    %v1203 = vadd.f32 %v1145, %v1197
    %v1204 = vadd.f32 %v1146, %v1200
    %v1205 = vadd.f32 %v74, %v1203
    %v1206 = vadd.f32 %v75, %v1204
    %v1207 = vld [vmem:[#allocation8 + $0x4] sm:$0x1]
    %v1208 = vld [vmem:[#allocation8 + $0x5] sm:$0x1]
    %v1209 = vsel %vm82, %v1203, 0.0
    %1210 = vadd.xlane.f32.xlu0 %v1209
    %v1211 = vpop.xlane.xlu0 %1210
    %v1212 = vsel %vm82, %v1204, 0.0
    %1213 = vadd.xlane.f32.xlu0 %v1212
    %v1214 = vpop.xlane.xlu0 %1213
    %v1215 = vmul.f32 %v1211, %v89
    %v1216 = vmul.f32 %v1214, %v89
    %v1217 = vsub.f32 %v1203, %v1215
    %v1218 = vsub.f32 %v1204, %v1216
    %v1219 = vmul.f32 %v1217, %v1217
    %v1220 = vmul.f32 %v1218, %v1218
    %v1221 = vsel %vm82, %v1219, 0.0
    %1222 = vadd.xlane.f32.xlu0 %v1221
    %v1223 = vpop.xlane.xlu0 %1222
    %v1224 = vsel %vm82, %v1220, 0.0
    %1225 = vadd.xlane.f32.xlu0 %v1224
    %v1226 = vpop.xlane.xlu0 %1225
    %v1227 = vmul.f32 %v1223, %v89
    %v1228 = vmul.f32 %v1226, %v89
    %v1229 = vadd.f32 %v1227, 1e-05
    %v1230 = vadd.f32 %v1228, 1e-05
    %v1231 = vrsqrt.pop %v1229
    %v1232 = vrsqrt.pop %v1230
    %v1233 = vmul.f32 %v1217, %v1231
    %v1234 = vmul.f32 %v1218, %v1232
    %v1235 = vlaneseq
    %v1236 = vshrl.u32 %v1235, 7
    %v1237 = vsub.s32 0, %v1236
    %v1238 = vrot.slane %v1207, %v1237
    %v1239 = vmul.f32 %v1233, %v1238
    %v1240 = vmul.f32 %v1234, %v1238
    %v1241 = vlaneseq
    %v1242 = vshrl.u32 %v1241, 7
    %v1243 = vsub.s32 0, %v1242
    %v1244 = vrot.slane %v1208, %v1243
    %v1245 = vadd.f32 %v1239, %v1244
    %v1246 = vadd.f32 %v1240, %v1244
    %v1247 = vpack.c.bf16 %v1246, %v1245
    %v1248 = vld [vmem:[#allocation7 + $0x40] sm:$0xf]
    %v1249 = vld [vmem:[#allocation7 + $0x44] sm:$0xf]
    %v1250 = vld [vmem:[#allocation7 + $0x48] sm:$0xf]
    %v1251 = vld [vmem:[#allocation7 + $0x4c] sm:$0xf]
    %v1252 = vld [vmem:[#allocation8 + $0xa] sm:$0x1]
    %v1253 = vlaneseq
    %v1254 = vshrl.u32 %v1253, 7
    %v1255 = vsub.s32 0, %v1254
    %v1256 = vrot.slane %v1252, %v1255
    %v1261 = vunpack.c.l.b16 %v1248
    %v1262 = vunpack.c.l.b16 %v1249
    %v1263 = vunpack.c.l.b16 %v1250
    %v1264 = vunpack.c.l.b16 %v1251
    %v1265 = vpack.c.b16 %v1262, %v1261
    %v1266 = vpack.c.b16 %v1264, %v1263
    %v1270 = vsel %vm82, %v1247, 0
    %1272 = vmatprep.subr.bf16.mxu0 0
    %1273 = vmatpush1.bf16.msra.mxu0 0
    %1274 = vmatprep.subr.bf16.mxu0 0
    %1275 = vmatpush1.bf16.msra.mxu0 0
    %1276 = vmatprep.subr.bf16.mxu0 0
    %1277 = vmatpush1.bf16.msra.mxu0 0
    %1278 = vmatprep.subr.bf16.mxu0 0
    %1279 = vmatpush1.bf16.msra.mxu0 0
    %1280 = vmatprep.subr.bf16.mxu0 0
    %1281 = vmatpush1.bf16.msra.mxu0 0
    %1282 = vmatprep.subr.bf16.mxu0 0
    %1283 = vmatpush1.bf16.msra.mxu0 0
    %1284 = vmatprep.subr.bf16.mxu0 0
    %1285 = vmatpush1.bf16.msra.mxu0 %v1266
    %1286 = vmatprep.subr.bf16.mxu0 0
    %1287 = vmatpush1.bf16.msra.mxu0 %v1265
    %1288 = vmatprep.subr.bf16.mxu0 0
    %1289 = vmatpush2.bf16.msra.mxu0 0
    %1290 = vmatprep.subr.bf16.mxu0 0
    %1291 = vmatpush2.bf16.msra.mxu0 0
    %1292 = vmatprep.subr.bf16.mxu0 0
    %1293 = vmatpush2.bf16.msra.mxu0 0
    %1294 = vmatprep.subr.bf16.mxu0 0
    %1295 = vmatpush2.bf16.msra.mxu0 0
    %1296 = vmatprep.subr.bf16.mxu0 0
    %1297 = vmatpush2.bf16.msra.mxu0 0
    %1298 = vmatprep.subr.bf16.mxu0 0
    %1299 = vmatpush2.bf16.msra.mxu0 0
    %1300 = vmatprep.subr.bf16.mxu0 0
    %1301 = vmatpush2.bf16.msra.mxu0 0
    %1302 = vmatprep.subr.bf16.mxu0 0
    %1303 = vmatpush2.bf16.msra.mxu0 0
    %1304 = vmatprep.mubr.bf16.mxu0 0
    %1305 = vmatmul.mubr.bf16.gmra.mxu0 %v1270
    %v1306 = vpop.f32.mrf.mxu0
    %v1307 = vadd.f32 %v1256, %v1306
    %v1308 = vpop.f32.mrf.mxu0
    %v1309 = vpop.f32.mrf.mxu0
    %v1310 = vadd.f32 %v1256, %v1309
    %v1311 = vpop.f32.mrf.mxu0
    %1312 = vdwg.mxu0
    %v1313 = vmul.f32 %v1307, 0.5
    %v1314 = vmul.f32 %v1310, 0.5
    %v1315 = vmul.f32 %v1307, 0.044715
    %v1316 = vmul.f32 %v1310, 0.044715
    %v1317 = vmul.f32 %v1315, %v1307
    %v1318 = vmul.f32 %v1316, %v1310
    %v1319 = vmul.f32 %v1317, %v1307
    %v1320 = vmul.f32 %v1318, %v1310
    %v1321 = vadd.f32 %v1307, %v1319
    %v1322 = vadd.f32 %v1310, %v1320
    %v1323 = vmul.f32 %v1321, 0.7978846
    %v1324 = vmul.f32 %v1322, 0.7978846
    %v1325 = vtanh.pop %v1323
    %v1326 = vtanh.pop %v1324
    %v1327 = vadd.f32 %v1325, 1.0
    %v1328 = vadd.f32 %v1326, 1.0
    %v1329 = vmul.f32 %v1313, %v1327
    %v1330 = vmul.f32 %v1314, %v1328
    %v1331 = vpack.c.bf16 %v1330, %v1329
    %v1332 = vld [vmem:[#allocation7 + $0x50] sm:$0xf]
    %v1333 = vld [vmem:[#allocation7 + $0x54] sm:$0xf]
    %v1334 = vld [vmem:[#allocation7 + $0x58] sm:$0xf]
    %v1335 = vld [vmem:[#allocation7 + $0x5c] sm:$0xf]
    %v1336 = vld [vmem:[#allocation7 + $0x60] sm:$0xf]
    %v1337 = vld [vmem:[#allocation7 + $0x64] sm:$0xf]
    %v1338 = vld [vmem:[#allocation7 + $0x68] sm:$0xf]
    %v1339 = vld [vmem:[#allocation7 + $0x6c] sm:$0xf]
    %v1340 = vld [vmem:[#allocation7 + $0x70] sm:$0xf]
    %v1341 = vld [vmem:[#allocation7 + $0x74] sm:$0xf]
    %v1342 = vld [vmem:[#allocation7 + $0x78] sm:$0xf]
    %v1343 = vld [vmem:[#allocation7 + $0x7c] sm:$0xf]
    %v1344 = vld [vmem:[#allocation7 + $0x80] sm:$0xf]
    %v1345 = vld [vmem:[#allocation7 + $0x84] sm:$0xf]
    %v1346 = vld [vmem:[#allocation7 + $0x88] sm:$0xf]
    %v1347 = vld [vmem:[#allocation7 + $0x8c] sm:$0xf]
    %v1348 = vld [vmem:[#allocation8 + $0xb] sm:$0x1]
    %v1349 = vlaneseq
    %v1350 = vshrl.u32 %v1349, 7
    %v1351 = vsub.s32 0, %v1350
    %v1352 = vrot.slane %v1348, %v1351
    %v1369 = vunpack.c.l.b16 %v1332
    %v1370 = vunpack.c.l.b16 %v1333
    %v1371 = vunpack.c.l.b16 %v1334
    %v1372 = vunpack.c.l.b16 %v1335
    %v1373 = vunpack.c.l.b16 %v1336
    %v1374 = vunpack.c.l.b16 %v1337
    %v1375 = vunpack.c.l.b16 %v1338
    %v1376 = vunpack.c.l.b16 %v1339
    %v1377 = vunpack.c.l.b16 %v1340
    %v1378 = vunpack.c.l.b16 %v1341
    %v1379 = vunpack.c.l.b16 %v1342
    %v1380 = vunpack.c.l.b16 %v1343
    %v1381 = vunpack.c.l.b16 %v1344
    %v1382 = vunpack.c.l.b16 %v1345
    %v1383 = vunpack.c.l.b16 %v1346
    %v1384 = vunpack.c.l.b16 %v1347
    %v1385 = vpack.c.b16 %v1370, %v1369
    %v1386 = vpack.c.b16 %v1372, %v1371
    %v1387 = vpack.c.b16 %v1374, %v1373
    %v1388 = vpack.c.b16 %v1376, %v1375
    %v1389 = vpack.c.b16 %v1378, %v1377
    %v1390 = vpack.c.b16 %v1380, %v1379
    %v1391 = vpack.c.b16 %v1382, %v1381
    %v1392 = vpack.c.b16 %v1384, %v1383
    %1401 = vmatprep.subr.bf16.mxu0 0
    %1402 = vmatpush1.bf16.msra.mxu0 %v1392
    %1403 = vmatprep.subr.bf16.mxu0 0
    %1404 = vmatpush1.bf16.msra.mxu0 %v1391
    %1405 = vmatprep.subr.bf16.mxu0 0
    %1406 = vmatpush1.bf16.msra.mxu0 %v1390
    %1407 = vmatprep.subr.bf16.mxu0 0
    %1408 = vmatpush1.bf16.msra.mxu0 %v1389
    %1409 = vmatprep.subr.bf16.mxu0 0
    %1410 = vmatpush1.bf16.msra.mxu0 %v1388
    %1411 = vmatprep.subr.bf16.mxu0 0
    %1412 = vmatpush1.bf16.msra.mxu0 %v1387
    %1413 = vmatprep.subr.bf16.mxu0 0
    %1414 = vmatpush1.bf16.msra.mxu0 %v1386
    %1415 = vmatprep.subr.bf16.mxu0 0
    %1416 = vmatpush1.bf16.msra.mxu0 %v1385
    %1417 = vmatprep.subr.bf16.mxu0 0
    %1418 = vmatpush2.bf16.msra.mxu0 0
    %1419 = vmatprep.subr.bf16.mxu0 0
    %1420 = vmatpush2.bf16.msra.mxu0 0
    %1421 = vmatprep.subr.bf16.mxu0 0
    %1422 = vmatpush2.bf16.msra.mxu0 0
    %1423 = vmatprep.subr.bf16.mxu0 0
    %1424 = vmatpush2.bf16.msra.mxu0 0
    %1425 = vmatprep.subr.bf16.mxu0 0
    %1426 = vmatpush2.bf16.msra.mxu0 0
    %1427 = vmatprep.subr.bf16.mxu0 0
    %1428 = vmatpush2.bf16.msra.mxu0 0
    %1429 = vmatprep.subr.bf16.mxu0 0
    %1430 = vmatpush2.bf16.msra.mxu0 0
    %1431 = vmatprep.subr.bf16.mxu0 0
    %1432 = vmatpush2.bf16.msra.mxu0 0
    %1433 = vmatprep.mubr.bf16.mxu0 0
    %1434 = vmatmul.mubr.bf16.gmra.mxu0 %v1331
    %v1435 = vpop.f32.mrf.mxu0
    %v1436 = vadd.f32 %v1352, %v1435
    %v1437 = vpop.f32.mrf.mxu0
    %v1438 = vpop.f32.mrf.mxu0
    %v1439 = vadd.f32 %v1352, %v1438
    %v1440 = vpop.f32.mrf.mxu0
    %1441 = vdwg.mxu0
    %v1442 = vadd.f32 %v1205, %v1436
    %v1443 = vadd.f32 %v1206, %v1439
    %1444 = vst.msk [vmem:[#allocation10] sm:$0xff] %vm82, %v1442
    %1445 = vst.msk [vmem:[#allocation10 + $0x8] sm:$0xff] %vm82, %v1443
    // Predicated region
    $region34: #{tpu_custom_call.1} parent=1 // pred_check
      _
    $region35: #{tpu_custom_call.1} parent=1 // pred_check_branch
      %1447 = sbr.rel (0) target = $region37
    $region36: #{tpu_custom_call.1} parent=1 // pred_region
      %s1449 = ssub.s32 256, 256
      %1450 = vsyncadd [#allocation4], %s1449
      %s1451 = sshll.u32 [#allocation10], 4
      %s1452 = int_to_ptr.vmem [resolvable:$true] %s1451
      %1457 = dma.vmem_to_hbm [thread:$0]  %s1452, 256, %s4, [#allocation4], 128, 128, 8
    $region37: #{tpu_custom_call.1} parent=1 // pred_fallthru
      _
    // Predicated region
    $region38: #{tpu_custom_call.1} parent=1 // pred_check
      _
    $region39: #{tpu_custom_call.1} parent=1 // pred_check_branch
      %1459 = sbr.rel (0) target = $region41
    $region40: #{tpu_custom_call.1} parent=1 // pred_region
      %1460 = dma.done [#allocation4], 256
    $region41: #{tpu_custom_call.1} parent=1 // pred_fallthru
      _
    %1461 = vsyncpa [#allocation3], 1
    %1462 = vsyncpa [#allocation6], 1
    %1463 = vsyncpa [#allocation9], 1
    %1464 = vsyncpa [#allocation4], 1

</llo_original>
